<compile_context>
chip_gen: v6e
topology: v6e:2x2x1
jax: 0.10.0
libtpu: 0.0.40
codegen_flags: <defaults>
</compile_context>

<pallas_src>
import jax
import jax.numpy as jnp
import numpy as np
from jax.experimental import pallas as pl
from jax.experimental.pallas import tpu as pltpu

_LANE = 128
_SUBLANE = 8
_HIDDEN = 512
_BN_EPS = 1e-5


def _round_up(n, m):
    return ((n + m - 1) // m) * m


def _pad2(a, rows, cols):
    a = jnp.asarray(a, jnp.float32)
    out = jnp.zeros((rows, cols), dtype=jnp.float32)
    return out.at[: a.shape[0], : a.shape[1]].set(a)


def _bias_layout(add_ic):
    """Row layout of the packed bias slab (order shared by init and kernel)."""
    num_blocks = len(add_ic)
    num_heads = sum(1 for a in add_ic if a)
    blk_rows = list(range(num_blocks))
    row = num_blocks
    head_rows = []
    for _ in range(num_heads):
        head_rows.append((row, row + 1))
        row += 2
    end_rows = (row, row + 1, row + 2)
    total = row + 3
    return blk_rows, head_rows, end_rows, total


# ----------------------------- Fused Pallas kernel ----------------------------

def _build_fused_kernel(add_ic, ch_pad, hid_pad, cls_pad):
    """Kernel closed over the static network structure.

    Ref order: x, w0 (block-0 weight), wsq (trunk blocks 1.. + end ew1),
               wup (head w1's + end ew2), wdn (head w2's + end ew3),
               bias slab, out.
    """
    add_ic = tuple(bool(a) for a in add_ic)
    num_blocks = len(add_ic)
    num_heads = sum(add_ic)
    blk_rows, head_rows, end_rows, _ = _bias_layout(add_ic)

    def kernel(x_ref, w0_ref, wsq_ref, wup_ref, wdn_ref, b_ref, out_ref):
        def mm(a, w):
            # bf16 x bf16 on the MXU with f32 accumulation.
            return jnp.dot(a.astype(jnp.bfloat16), w,
                           preferred_element_type=jnp.float32)

        def bias(row, width):
            # Static (1, width) slice from the packed f32 bias slab.
            return b_ref[row:row + 1, :width]

        f = x_ref[...]                                     # (TM, in_pad) f32
        head_i = 0
        for i in range(num_blocks):
            w = w0_ref[...] if i == 0 else wsq_ref[i - 1]
            # Linear -> BatchNorm1d(eval, folded into w/b) -> ReLU
            f = jnp.maximum(mm(f, w) + bias(blk_rows[i], ch_pad), 0.0)
            if add_ic[i]:
                r1, r2 = head_rows[head_i]
                # IC head: Linear -> Dropout(identity) -> Linear
                h = mm(f, wup_ref[head_i]) + bias(r1, hid_pad)
                out_ref[head_i, :, :] = mm(h, wdn_ref[head_i]) + bias(r2, cls_pad)
                head_i += 1
        # End block: Linear -> Dropout -> Linear -> Dropout -> Linear
        r1, r2, r3 = end_rows
        e = mm(f, wsq_ref[num_blocks - 1]) + bias(r1, ch_pad)
        e = mm(e, wup_ref[num_heads]) + bias(r2, hid_pad)
        out_ref[num_heads, :, :] = mm(e, wdn_ref[num_heads]) + bias(r3, cls_pad)

    return kernel


# --------------------------- Parameter construction ---------------------------

def _linear_raw(key, fan_in, fan_out):
    # Matches FCN_SDN_2.initialize_weights: weight ~ N(0, 0.01), bias = 0.
    # Stored transposed relative to nn.Linear: (fan_in, fan_out).
    w = 0.01 * jax.random.normal(key, (fan_in, fan_out), dtype=jnp.float32)
    b = jnp.zeros((1, fan_out), dtype=jnp.float32)
    return w, b


def init_fcn_sdn_2(key, cfg):
    input_size = int(cfg["input_size"])
    num_classes = int(cfg["num_classes"])
    in_channels = int(cfg["in_channels"][1])
    add_ic = tuple(int(a) for a in cfg["add_ic"])
    num_blocks = len(add_ic)
    num_heads = sum(add_ic)

    in_pad = _round_up(input_size, _LANE)
    ch_pad = _round_up(in_channels, _LANE)
    cls_pad = _round_up(num_classes, _LANE)
    hid_pad = _round_up(_HIDDEN, _LANE)

    n_linear = num_blocks + 2 * num_heads + 3
    keys = list(jax.random.split(key, n_linear))
    ki = iter(range(n_linear))

    raw_blocks, raw_heads = [], []
    w0 = None
    wsq, wup, wdn = [], [], []

    blk_rows, head_rows, end_rows, n_rows = _bias_layout(add_ic)
    bias_slab = jnp.zeros((_round_up(n_rows, _SUBLANE), hid_pad), jnp.float32)

    def put_bias(slab, row, b):
        return slab.at[row, : b.shape[1]].set(b[0])

    head_i = 0
    for layer_id, add_output in enumerate(add_ic):
        fan_in = input_size if layer_id == 0 else in_channels
        fan_in_p = in_pad if layer_id == 0 else ch_pad
        w, b = _linear_raw(keys[next(ki)], fan_in, in_channels)
        # BatchNorm1d defaults: gamma=1, beta=0, running_mean=0, running_var=1
        gamma = jnp.ones((1, in_channels), jnp.float32)
        beta = jnp.zeros((1, in_channels), jnp.float32)
        mean = jnp.zeros((1, in_channels), jnp.float32)
        var = jnp.ones((1, in_channels), jnp.float32)
        raw_blocks.append({"w": w, "b": b, "gamma": gamma, "beta": beta,
                           "mean": mean, "var": var})
        # Fold eval-mode BN into the Linear (exact affine fold), then cast bf16.
        scale = gamma / jnp.sqrt(var + _BN_EPS)
        shift = beta - mean * scale
        w_f = _pad2(w * scale, fan_in_p, ch_pad).astype(jnp.bfloat16)
        b_f = b * scale + shift
        if layer_id == 0:
            w0 = w_f
        else:
            wsq.append(w_f)
        bias_slab = put_bias(bias_slab, blk_rows[layer_id], b_f)

        if add_output:
            hw1, hb1 = _linear_raw(keys[next(ki)], in_channels, _HIDDEN)
            hw2, hb2 = _linear_raw(keys[next(ki)], _HIDDEN, num_classes)
            raw_heads.append((hw1, hb1, hw2, hb2))
            wup.append(_pad2(hw1, ch_pad, hid_pad).astype(jnp.bfloat16))
            wdn.append(_pad2(hw2, hid_pad, cls_pad).astype(jnp.bfloat16))
            r1, r2 = head_rows[head_i]
            bias_slab = put_bias(bias_slab, r1, hb1)
            bias_slab = put_bias(bias_slab, r2, hb2)
            head_i += 1

    ew1, eb1 = _linear_raw(keys[next(ki)], in_channels, in_channels)
    ew2, eb2 = _linear_raw(keys[next(ki)], in_channels, _HIDDEN)
    ew3, eb3 = _linear_raw(keys[next(ki)], _HIDDEN, num_classes)
    raw_end = (ew1, eb1, ew2, eb2, ew3, eb3)
    wsq.append(_pad2(ew1, ch_pad, ch_pad).astype(jnp.bfloat16))
    wup.append(_pad2(ew2, ch_pad, hid_pad).astype(jnp.bfloat16))
    wdn.append(_pad2(ew3, hid_pad, cls_pad).astype(jnp.bfloat16))
    r1, r2, r3 = end_rows
    bias_slab = put_bias(bias_slab, r1, eb1)
    bias_slab = put_bias(bias_slab, r2, eb2)
    bias_slab = put_bias(bias_slab, r3, eb3)

    arrays = {
        "w0": w0,                      # (in_pad, ch_pad)               bf16
        "wsq": jnp.stack(wsq),         # (num_blocks, ch_pad, ch_pad)   bf16
        "wup": jnp.stack(wup),         # (num_heads+1, ch_pad, hid_pad) bf16
        "wdn": jnp.stack(wdn),         # (num_heads+1, hid_pad, cls_pad) bf16
        "bias": bias_slab,             # (n_rows_pad, hid_pad)          f32
    }
    return {
        "add_ic": add_ic,
        "dims": {"input_size": input_size, "num_classes": num_classes,
                 "in_channels": in_channels, "in_pad": in_pad, "ch_pad": ch_pad,
                 "cls_pad": cls_pad, "hid_pad": hid_pad},
        "arrays": arrays,
        "raw": {"blocks": raw_blocks, "heads": raw_heads, "end": raw_end},
    }


# -------------------------------- Forward pass --------------------------------

def make_fcn_sdn_2_forward(model):
    """Returns fwd(x) mirroring FCN_SDN_2.forward: [IC outputs..., final]."""
    add_ic = model["add_ic"]
    dims = model["dims"]
    num_blocks = len(add_ic)
    num_heads = sum(add_ic)
    num_outputs = num_heads + 1
    in_pad, ch_pad = dims["in_pad"], dims["ch_pad"]
    cls_pad, hid_pad = dims["cls_pad"], dims["hid_pad"]
    nc = dims["num_classes"]

    kernel = _build_fused_kernel(add_ic, ch_pad, hid_pad, cls_pad)

    @jax.jit
    def forward(x, w0, wsq, wup, wdn, bias_slab):
        batch, feat = x.shape
        tm = 256 if batch >= 256 else _round_up(max(batch, 1), _SUBLANE)
        b_pad = _round_up(batch, tm)
        n_tiles = b_pad // tm

        # NOTE: zero-padded batch rows produce ReLU(folded_bias) rather than 0
        # when BN beta / bias are nonzero; harmless because those rows are
        # sliced off below — do not reuse them.
        x_pad = jnp.zeros((b_pad, in_pad), jnp.float32).at[:batch, :feat].set(
            x.astype(jnp.float32))

        out_shape = jax.ShapeDtypeStruct((num_outputs, b_pad, cls_pad),
                                         jnp.float32)

        # Advisory cost estimate (padded dims, bf16 weight bytes).
        flops = 2 * b_pad * in_pad * ch_pad
        flops += 2 * b_pad * ch_pad * ch_pad * (num_blocks - 1)
        flops += 2 * b_pad * (num_heads + 1) * (ch_pad * hid_pad + hid_pad * cls_pad)
        flops += 2 * b_pad * ch_pad * ch_pad  # end-block ew1
        weight_bytes = sum(int(np.prod(a.shape)) * a.dtype.itemsize
                           for a in (w0, wsq, wup, wdn, bias_slab))
        bytes_accessed = (weight_bytes + x_pad.size * 4
                          + num_outputs * b_pad * cls_pad * 4)
        cost = pl.CostEstimate(flops=flops, transcendentals=0,
                               bytes_accessed=bytes_accessed)

        # Weight index_maps always return block 0 -> weights stay resident in
        # VMEM across the batch grid; only x / out stream per batch tile.
        def resident(shape):
            return pl.BlockSpec(shape, lambda i: (0,) * len(shape))

        out = pl.pallas_call(
            kernel,
            out_shape=out_shape,
            grid=(n_tiles,),
            in_specs=[
                pl.BlockSpec((tm, in_pad), lambda i: (i, 0)),
                resident(w0.shape),
                resident(wsq.shape),
                resident(wup.shape),
                resident(wdn.shape),
                resident(bias_slab.shape),
            ],
            out_specs=pl.BlockSpec((num_outputs, tm, cls_pad),
                                   lambda i: (0, i, 0)),
            compiler_params=pltpu.CompilerParams(
                dimension_semantics=("parallel",)),
            cost_estimate=cost,
        )(x_pad, w0, wsq, wup, wdn, bias_slab)

        return [out[i, :batch, :nc] for i in range(num_outputs)]

    arrs = model["arrays"]

    def fwd(x):
        return forward(x, arrs["w0"], arrs["wsq"], arrs["wup"],
                       arrs["wdn"], arrs["bias"])

    return fwd


# -------------------------- Pure-JAX references (checks) -----------------------

def _fold_block(blk):
    scale = blk["gamma"] / jnp.sqrt(blk["var"] + _BN_EPS)
    shift = blk["beta"] - blk["mean"] * scale
    return blk["w"] * scale, blk["b"] * scale + shift


def reference_forward_bf16(model, x):
    """Same math as the kernel: bf16 weights/activations, f32 accumulation."""
    raw, add_ic = model["raw"], model["add_ic"]

    def mm(a, w):
        return jnp.dot(a.astype(jnp.bfloat16), w.astype(jnp.bfloat16),
                       preferred_element_type=jnp.float32)

    outs, f, head_i = [], x, 0
    for i, blk in enumerate(raw["blocks"]):
        w_f, b_f = _fold_block(blk)
        f = jnp.maximum(mm(f, w_f) + b_f, 0.0)
        if add_ic[i]:
            w1, b1, w2, b2 = raw["heads"][head_i]
            head_i += 1
            outs.append(mm(mm(f, w1) + b1, w2) + b2)
    ew1, eb1, ew2, eb2, ew3, eb3 = raw["end"]
    outs.append(mm(mm(mm(f, ew1) + eb1, ew2) + eb2, ew3) + eb3)
    return outs


def reference_forward_f32(model, x):
    raw, add_ic = model["raw"], model["add_ic"]
    outs, f, head_i = [], x, 0
    for i, blk in enumerate(raw["blocks"]):
        y = f @ blk["w"] + blk["b"]
        y = (y - blk["mean"]) * (blk["gamma"] / jnp.sqrt(blk["var"] + _BN_EPS)) \
            + blk["beta"]
        f = jnp.maximum(y, 0.0)
        if add_ic[i]:
            w1, b1, w2, b2 = raw["heads"][head_i]
            head_i += 1
            outs.append((f @ w1 + b1) @ w2 + b2)
    ew1, eb1, ew2, eb2, ew3, eb3 = raw["end"]
    outs.append(((f @ ew1 + eb1) @ ew2 + eb2) @ ew3 + eb3)
    return outs


# ------------------------------------ Main -------------------------------------

if __name__ == "__main__":
    cfg = {
        "input_size": 16,
        "num_classes": 10,
        "init_weights": True,
        "add_ic": [1, 0, 1],          # 2 internal classifiers + final output
        "in_channels": [3, 32],       # module uses in_channels[1]
        "augment_training": False,
    }

    key = jax.random.PRNGKey(0)
    k_param, k_x = jax.random.split(key)
    model = init_fcn_sdn_2(k_param, cfg)
    forward = make_fcn_sdn_2_forward(model)

    batch = 2
    x = jax.random.normal(k_x, (batch, cfg["input_size"]), dtype=jnp.float32)

    outs = forward(x)
    outs = jax.block_until_ready(outs)

    expected_num_outputs = sum(cfg["add_ic"]) + 1
    assert len(outs) == expected_num_outputs
    for o in outs:
        assert o.shape == (batch, cfg["num_classes"])
        assert o.dtype == jnp.float32

    # Tight check vs. a bf16-matched JAX reference (same casting scheme).
    for o, r in zip(outs, reference_forward_bf16(model, x)):
        np.testing.assert_allclose(np.asarray(o), np.asarray(r),
                                   rtol=1e-2, atol=1e-8)

    # Loose sanity check vs. the full-f32 reference (bf16 weight rounding).
    for o, r in zip(outs, reference_forward_f32(model, x)):
        np.testing.assert_allclose(np.asarray(o), np.asarray(r),
                                   rtol=1e-1, atol=1e-6)

    print("KERNEL_OK")
</pallas_src>

<mosaic_0001>
module attributes {stable_mosaic.version = 11 : i64} {
  func.func @kernel(%arg0: i32, %arg1: memref<8x128xf32, #tpu.memory_space<vmem>>, %arg2: memref<128x128xbf16, #tpu.memory_space<vmem>>, %arg3: memref<3x128x128xbf16, #tpu.memory_space<vmem>>, %arg4: memref<3x128x512xbf16, #tpu.memory_space<vmem>>, %arg5: memref<3x512x128xbf16, #tpu.memory_space<vmem>>, %arg6: memref<16x512xf32, #tpu.memory_space<vmem>>, %arg7: memref<3x8x128xf32, #tpu.memory_space<vmem>>) attributes {dimension_semantics = [#tpu.dimension_semantics<parallel>], iteration_bounds = array<i64: 1>, scalar_prefetch = 0 : i64, scratch_operands = 0 : i64, tpu.core_type = #tpu.core_type<tc>, window_params = [{transform_indices = @transform_0, window_bounds = array<i64: 8, 128>}, {pipeline_mode = #tpu.pipeline_mode<synchronous>, transform_indices = @transform_1, window_bounds = array<i64: 128, 128>}, {pipeline_mode = #tpu.pipeline_mode<synchronous>, transform_indices = @transform_2, window_bounds = array<i64: 3, 128, 128>}, {pipeline_mode = #tpu.pipeline_mode<synchronous>, transform_indices = @transform_3, window_bounds = array<i64: 3, 128, 512>}, {pipeline_mode = #tpu.pipeline_mode<synchronous>, transform_indices = @transform_4, window_bounds = array<i64: 3, 512, 128>}, {pipeline_mode = #tpu.pipeline_mode<synchronous>, transform_indices = @transform_5, window_bounds = array<i64: 16, 512>}, {transform_indices = @transform_6, window_bounds = array<i64: 3, 8, 128>}]} {
    %c0 = arith.constant 0 : index
    %c0_0 = arith.constant 0 : index
    %0 = vector.load %arg1[%c0, %c0_0] : memref<8x128xf32, #tpu.memory_space<vmem>>, vector<8x128xf32>
    %c0_1 = arith.constant 0 : index
    %c0_2 = arith.constant 0 : index
    %1 = vector.load %arg2[%c0_1, %c0_2] : memref<128x128xbf16, #tpu.memory_space<vmem>>, vector<128x128xbf16>
    %2 = arith.truncf %0 : vector<8x128xf32> to vector<8x128xbf16>
    %cst = arith.constant dense<0.000000e+00> : vector<8x128xf32>
    %3 = tpu.matmul %2, %1, %cst {dimension_numbers = #tpu.dot_dimension_numbers<[1], [0], [0], [1], [0, 0, 1, 1], [], []>} : vector<8x128xbf16>, vector<128x128xbf16>, vector<8x128xf32> -> vector<8x128xf32>
    %c0_3 = arith.constant 0 : index
    %c0_4 = arith.constant 0 : index
    %4 = vector.load %arg6[%c0_3, %c0_4] : memref<16x512xf32, #tpu.memory_space<vmem>>, vector<1x128xf32>
    %5 = vector.broadcast %4 : vector<1x128xf32> to vector<8x128xf32>
    %6 = arith.addf %3, %5 : vector<8x128xf32>
    %cst_5 = arith.constant 0.000000e+00 : f32
    %7 = vector.broadcast %cst_5 : f32 to vector<8x128xf32>
    %8 = arith.maximumf %6, %7 : vector<8x128xf32>
    %c0_6 = arith.constant 0 : index
    %c0_7 = arith.constant 0 : index
    %c0_8 = arith.constant 0 : index
    %9 = vector.load %arg4[%c0_6, %c0_7, %c0_8] : memref<3x128x512xbf16, #tpu.memory_space<vmem>>, vector<1x128x512xbf16>
    %10 = vector.shape_cast %9 : vector<1x128x512xbf16> to vector<128x512xbf16>
    %11 = arith.truncf %8 : vector<8x128xf32> to vector<8x128xbf16>
    %cst_9 = arith.constant dense<0.000000e+00> : vector<8x512xf32>
    %12 = tpu.matmul %11, %10, %cst_9 {dimension_numbers = #tpu.dot_dimension_numbers<[1], [0], [0], [1], [0, 0, 1, 1], [], []>} : vector<8x128xbf16>, vector<128x512xbf16>, vector<8x512xf32> -> vector<8x512xf32>
    %c3 = arith.constant 3 : index
    %c0_10 = arith.constant 0 : index
    %13 = vector.load %arg6[%c3, %c0_10] : memref<16x512xf32, #tpu.memory_space<vmem>>, vector<1x512xf32>
    %14 = vector.broadcast %13 : vector<1x512xf32> to vector<8x512xf32>
    %15 = arith.addf %12, %14 : vector<8x512xf32>
    %c0_11 = arith.constant 0 : index
    %c0_12 = arith.constant 0 : index
    %c0_13 = arith.constant 0 : index
    %16 = vector.load %arg5[%c0_11, %c0_12, %c0_13] : memref<3x512x128xbf16, #tpu.memory_space<vmem>>, vector<1x512x128xbf16>
    %17 = vector.shape_cast %16 : vector<1x512x128xbf16> to vector<512x128xbf16>
    %18 = arith.truncf %15 : vector<8x512xf32> to vector<8x512xbf16>
    %cst_14 = arith.constant dense<0.000000e+00> : vector<8x128xf32>
    %19 = tpu.matmul %18, %17, %cst_14 {dimension_numbers = #tpu.dot_dimension_numbers<[1], [0], [0], [1], [0, 0, 1, 1], [], []>} : vector<8x512xbf16>, vector<512x128xbf16>, vector<8x128xf32> -> vector<8x128xf32>
    %c4 = arith.constant 4 : index
    %c0_15 = arith.constant 0 : index
    %20 = vector.load %arg6[%c4, %c0_15] : memref<16x512xf32, #tpu.memory_space<vmem>>, vector<1x128xf32>
    %21 = vector.broadcast %20 : vector<1x128xf32> to vector<8x128xf32>
    %22 = arith.addf %19, %21 : vector<8x128xf32>
    %c0_16 = arith.constant 0 : index
    %c0_17 = arith.constant 0 : index
    %c0_18 = arith.constant 0 : index
    %23 = vector.load %arg7[%c0_16, %c0_17, %c0_18] : memref<3x8x128xf32, #tpu.memory_space<vmem>>, vector<1x8x128xf32>
    %24 = vector.shape_cast %23 : vector<1x8x128xf32> to vector<8x128xf32>
    %25 = vector.shape_cast %22 : vector<8x128xf32> to vector<1x8x128xf32>
    tpu.vector_store %arg7[%c0_16, %c0_17, %c0_18], %25 {strides = array<i32>} : memref<3x8x128xf32, #tpu.memory_space<vmem>>, vector<1x8x128xf32>,
    %c0_19 = arith.constant 0 : index
    %c0_20 = arith.constant 0 : index
    %c0_21 = arith.constant 0 : index
    %26 = vector.load %arg3[%c0_19, %c0_20, %c0_21] : memref<3x128x128xbf16, #tpu.memory_space<vmem>>, vector<1x128x128xbf16>
    %27 = vector.shape_cast %26 : vector<1x128x128xbf16> to vector<128x128xbf16>
    %28 = arith.truncf %8 : vector<8x128xf32> to vector<8x128xbf16>
    %cst_22 = arith.constant dense<0.000000e+00> : vector<8x128xf32>
    %29 = tpu.matmul %28, %27, %cst_22 {dimension_numbers = #tpu.dot_dimension_numbers<[1], [0], [0], [1], [0, 0, 1, 1], [], []>} : vector<8x128xbf16>, vector<128x128xbf16>, vector<8x128xf32> -> vector<8x128xf32>
    %c1 = arith.constant 1 : index
    %c0_23 = arith.constant 0 : index
    %30 = vector.load %arg6[%c1, %c0_23] : memref<16x512xf32, #tpu.memory_space<vmem>>, vector<1x128xf32>
    %31 = vector.broadcast %30 : vector<1x128xf32> to vector<8x128xf32>
    %32 = arith.addf %29, %31 : vector<8x128xf32>
    %cst_24 = arith.constant 0.000000e+00 : f32
    %33 = vector.broadcast %cst_24 : f32 to vector<8x128xf32>
    %34 = arith.maximumf %32, %33 : vector<8x128xf32>
    %c1_25 = arith.constant 1 : index
    %c0_26 = arith.constant 0 : index
    %c0_27 = arith.constant 0 : index
    %35 = vector.load %arg3[%c1_25, %c0_26, %c0_27] : memref<3x128x128xbf16, #tpu.memory_space<vmem>>, vector<1x128x128xbf16>
    %36 = vector.shape_cast %35 : vector<1x128x128xbf16> to vector<128x128xbf16>
    %37 = arith.truncf %34 : vector<8x128xf32> to vector<8x128xbf16>
    %cst_28 = arith.constant dense<0.000000e+00> : vector<8x128xf32>
    %38 = tpu.matmul %37, %36, %cst_28 {dimension_numbers = #tpu.dot_dimension_numbers<[1], [0], [0], [1], [0, 0, 1, 1], [], []>} : vector<8x128xbf16>, vector<128x128xbf16>, vector<8x128xf32> -> vector<8x128xf32>
    %c2 = arith.constant 2 : index
    %c0_29 = arith.constant 0 : index
    %39 = vector.load %arg6[%c2, %c0_29] : memref<16x512xf32, #tpu.memory_space<vmem>>, vector<1x128xf32>
    %40 = vector.broadcast %39 : vector<1x128xf32> to vector<8x128xf32>
    %41 = arith.addf %38, %40 : vector<8x128xf32>
    %cst_30 = arith.constant 0.000000e+00 : f32
    %42 = vector.broadcast %cst_30 : f32 to vector<8x128xf32>
    %43 = arith.maximumf %41, %42 : vector<8x128xf32>
    %c1_31 = arith.constant 1 : index
    %c0_32 = arith.constant 0 : index
    %c0_33 = arith.constant 0 : index
    %44 = vector.load %arg4[%c1_31, %c0_32, %c0_33] : memref<3x128x512xbf16, #tpu.memory_space<vmem>>, vector<1x128x512xbf16>
    %45 = vector.shape_cast %44 : vector<1x128x512xbf16> to vector<128x512xbf16>
    %46 = arith.truncf %43 : vector<8x128xf32> to vector<8x128xbf16>
    %cst_34 = arith.constant dense<0.000000e+00> : vector<8x512xf32>
    %47 = tpu.matmul %46, %45, %cst_34 {dimension_numbers = #tpu.dot_dimension_numbers<[1], [0], [0], [1], [0, 0, 1, 1], [], []>} : vector<8x128xbf16>, vector<128x512xbf16>, vector<8x512xf32> -> vector<8x512xf32>
    %c5 = arith.constant 5 : index
    %c0_35 = arith.constant 0 : index
    %48 = vector.load %arg6[%c5, %c0_35] : memref<16x512xf32, #tpu.memory_space<vmem>>, vector<1x512xf32>
    %49 = vector.broadcast %48 : vector<1x512xf32> to vector<8x512xf32>
    %50 = arith.addf %47, %49 : vector<8x512xf32>
    %c1_36 = arith.constant 1 : index
    %c0_37 = arith.constant 0 : index
    %c0_38 = arith.constant 0 : index
    %51 = vector.load %arg5[%c1_36, %c0_37, %c0_38] : memref<3x512x128xbf16, #tpu.memory_space<vmem>>, vector<1x512x128xbf16>
    %52 = vector.shape_cast %51 : vector<1x512x128xbf16> to vector<512x128xbf16>
    %53 = arith.truncf %50 : vector<8x512xf32> to vector<8x512xbf16>
    %cst_39 = arith.constant dense<0.000000e+00> : vector<8x128xf32>
    %54 = tpu.matmul %53, %52, %cst_39 {dimension_numbers = #tpu.dot_dimension_numbers<[1], [0], [0], [1], [0, 0, 1, 1], [], []>} : vector<8x512xbf16>, vector<512x128xbf16>, vector<8x128xf32> -> vector<8x128xf32>
    %c6 = arith.constant 6 : index
    %c0_40 = arith.constant 0 : index
    %55 = vector.load %arg6[%c6, %c0_40] : memref<16x512xf32, #tpu.memory_space<vmem>>, vector<1x128xf32>
    %56 = vector.broadcast %55 : vector<1x128xf32> to vector<8x128xf32>
    %57 = arith.addf %54, %56 : vector<8x128xf32>
    %c1_41 = arith.constant 1 : index
    %c0_42 = arith.constant 0 : index
    %c0_43 = arith.constant 0 : index
    %58 = vector.load %arg7[%c1_41, %c0_42, %c0_43] : memref<3x8x128xf32, #tpu.memory_space<vmem>>, vector<1x8x128xf32>
    %59 = vector.shape_cast %58 : vector<1x8x128xf32> to vector<8x128xf32>
    %60 = vector.shape_cast %57 : vector<8x128xf32> to vector<1x8x128xf32>
    tpu.vector_store %arg7[%c1_41, %c0_42, %c0_43], %60 {strides = array<i32>} : memref<3x8x128xf32, #tpu.memory_space<vmem>>, vector<1x8x128xf32>,
    %c2_44 = arith.constant 2 : index
    %c0_45 = arith.constant 0 : index
    %c0_46 = arith.constant 0 : index
    %61 = vector.load %arg3[%c2_44, %c0_45, %c0_46] : memref<3x128x128xbf16, #tpu.memory_space<vmem>>, vector<1x128x128xbf16>
    %62 = vector.shape_cast %61 : vector<1x128x128xbf16> to vector<128x128xbf16>
    %63 = arith.truncf %43 : vector<8x128xf32> to vector<8x128xbf16>
    %cst_47 = arith.constant dense<0.000000e+00> : vector<8x128xf32>
    %64 = tpu.matmul %63, %62, %cst_47 {dimension_numbers = #tpu.dot_dimension_numbers<[1], [0], [0], [1], [0, 0, 1, 1], [], []>} : vector<8x128xbf16>, vector<128x128xbf16>, vector<8x128xf32> -> vector<8x128xf32>
    %c7 = arith.constant 7 : index
    %c0_48 = arith.constant 0 : index
    %65 = vector.load %arg6[%c7, %c0_48] : memref<16x512xf32, #tpu.memory_space<vmem>>, vector<1x128xf32>
    %66 = vector.broadcast %65 : vector<1x128xf32> to vector<8x128xf32>
    %67 = arith.addf %64, %66 : vector<8x128xf32>
    %c2_49 = arith.constant 2 : index
    %c0_50 = arith.constant 0 : index
    %c0_51 = arith.constant 0 : index
    %68 = vector.load %arg4[%c2_49, %c0_50, %c0_51] : memref<3x128x512xbf16, #tpu.memory_space<vmem>>, vector<1x128x512xbf16>
    %69 = vector.shape_cast %68 : vector<1x128x512xbf16> to vector<128x512xbf16>
    %70 = arith.truncf %67 : vector<8x128xf32> to vector<8x128xbf16>
    %cst_52 = arith.constant dense<0.000000e+00> : vector<8x512xf32>
    %71 = tpu.matmul %70, %69, %cst_52 {dimension_numbers = #tpu.dot_dimension_numbers<[1], [0], [0], [1], [0, 0, 1, 1], [], []>} : vector<8x128xbf16>, vector<128x512xbf16>, vector<8x512xf32> -> vector<8x512xf32>
    %c8 = arith.constant 8 : index
    %c0_53 = arith.constant 0 : index
    %72 = vector.load %arg6[%c8, %c0_53] : memref<16x512xf32, #tpu.memory_space<vmem>>, vector<1x512xf32>
    %73 = vector.broadcast %72 : vector<1x512xf32> to vector<8x512xf32>
    %74 = arith.addf %71, %73 : vector<8x512xf32>
    %c2_54 = arith.constant 2 : index
    %c0_55 = arith.constant 0 : index
    %c0_56 = arith.constant 0 : index
    %75 = vector.load %arg5[%c2_54, %c0_55, %c0_56] : memref<3x512x128xbf16, #tpu.memory_space<vmem>>, vector<1x512x128xbf16>
    %76 = vector.shape_cast %75 : vector<1x512x128xbf16> to vector<512x128xbf16>
    %77 = arith.truncf %74 : vector<8x512xf32> to vector<8x512xbf16>
    %cst_57 = arith.constant dense<0.000000e+00> : vector<8x128xf32>
    %78 = tpu.matmul %77, %76, %cst_57 {dimension_numbers = #tpu.dot_dimension_numbers<[1], [0], [0], [1], [0, 0, 1, 1], [], []>} : vector<8x512xbf16>, vector<512x128xbf16>, vector<8x128xf32> -> vector<8x128xf32>
    %c9 = arith.constant 9 : index
    %c0_58 = arith.constant 0 : index
    %79 = vector.load %arg6[%c9, %c0_58] : memref<16x512xf32, #tpu.memory_space<vmem>>, vector<1x128xf32>
    %80 = vector.broadcast %79 : vector<1x128xf32> to vector<8x128xf32>
    %81 = arith.addf %78, %80 : vector<8x128xf32>
    %c2_59 = arith.constant 2 : index
    %c0_60 = arith.constant 0 : index
    %c0_61 = arith.constant 0 : index
    %82 = vector.load %arg7[%c2_59, %c0_60, %c0_61] : memref<3x8x128xf32, #tpu.memory_space<vmem>>, vector<1x8x128xf32>
    %83 = vector.shape_cast %82 : vector<1x8x128xf32> to vector<8x128xf32>
    %84 = vector.shape_cast %81 : vector<8x128xf32> to vector<1x8x128xf32>
    tpu.vector_store %arg7[%c2_59, %c0_60, %c0_61], %84 {strides = array<i32>} : memref<3x8x128xf32, #tpu.memory_space<vmem>>, vector<1x8x128xf32>,
    return
  }
  func.func @transform_0(%arg0: i32) -> (i32, i32) {
    %c0_i32 = arith.constant 0 : i32
    %c0_i32_0 = arith.constant 0 : i32
    return %arg0, %c0_i32 : i32, i32
  }
  func.func @transform_1(%arg0: i32) -> (i32, i32) {
    %c0_i32 = arith.constant 0 : i32
    %c0_i32_0 = arith.constant 0 : i32
    %c0_i32_1 = arith.constant 0 : i32
    return %c0_i32, %c0_i32_0 : i32, i32
  }
  func.func @transform_2(%arg0: i32) -> (i32, i32, i32) {
    %c0_i32 = arith.constant 0 : i32
    %c0_i32_0 = arith.constant 0 : i32
    %c0_i32_1 = arith.constant 0 : i32
    %c0_i32_2 = arith.constant 0 : i32
    return %c0_i32, %c0_i32_0, %c0_i32_1 : i32, i32, i32
  }
  func.func @transform_3(%arg0: i32) -> (i32, i32, i32) {
    %c0_i32 = arith.constant 0 : i32
    %c0_i32_0 = arith.constant 0 : i32
    %c0_i32_1 = arith.constant 0 : i32
    %c0_i32_2 = arith.constant 0 : i32
    return %c0_i32, %c0_i32_0, %c0_i32_1 : i32, i32, i32
  }
  func.func @transform_4(%arg0: i32) -> (i32, i32, i32) {
    %c0_i32 = arith.constant 0 : i32
    %c0_i32_0 = arith.constant 0 : i32
    %c0_i32_1 = arith.constant 0 : i32
    %c0_i32_2 = arith.constant 0 : i32
    return %c0_i32, %c0_i32_0, %c0_i32_1 : i32, i32, i32
  }
  func.func @transform_5(%arg0: i32) -> (i32, i32) {
    %c0_i32 = arith.constant 0 : i32
    %c0_i32_0 = arith.constant 0 : i32
    %c0_i32_1 = arith.constant 0 : i32
    return %c0_i32, %c0_i32_0 : i32, i32
  }
  func.func @transform_6(%arg0: i32) -> (i32, i32, i32) {
    %c0_i32 = arith.constant 0 : i32
    %c0_i32_0 = arith.constant 0 : i32
    %c0_i32_1 = arith.constant 0 : i32
    return %c0_i32, %arg0, %c0_i32_0 : i32, i32, i32
  }
}

</mosaic_0001>

<llo_original>
// kernel: forward.1
$region0: #{forward.1}
  #allocation0 [shape = 'u32[]', space=smem, size = 0x4, offset = 0x4, fixed_abs, tag = 'smem constant byte address 0x4 - core index']
  #allocation1 [shape = 'u32[144,128]{1,0:T(1,128)}', space=vmem, size = 0x12000, scoped, tag = 'internal scratch']
  %s0 = inlined_call_operand.vmem [shape: f32[8,128], index: 0, kind: input, shape index: {}]
  %s1 = inlined_call_operand.hbm [shape: bf16[128,128], index: 1, kind: input, shape index: {}]
  %s2 = inlined_call_operand.hbm [shape: bf16[3,128,128], index: 2, kind: input, shape index: {}]
  %s3 = inlined_call_operand.hbm [shape: bf16[3,128,512], index: 3, kind: input, shape index: {}]
  %s4 = inlined_call_operand.hbm [shape: bf16[3,512,128], index: 4, kind: input, shape index: {}]
  %s5 = inlined_call_operand.hbm [shape: f32[16,512], index: 5, kind: input, shape index: {}]
  %s6 = inlined_call_operand.vmem [shape: f32[3,8,128], index: 6, kind: output, shape index: {}]
  %s7 = sld [smem:[#allocation0]]
  $region54: #{forward.1} parent=0
    _
  %s9 = ssub.s32 1, %s7
  %s10 = scalar_select 0, %s9, %s7
  $region1: #{forward.1} parent=0
    #allocation2 [shape = 'u8[32768]{0}', space=vmem, size = 0x8000, scoped, tag = 'input window, operand 1, single buffered']
    #allocation3 [shape = 's32[1]{0}', space=sflag, size = 0x4, scoped, tag = 'scoped memory for forward.1']
    #allocation4 [shape = 'u8[98304]{0}', space=vmem, size = 0x18000, scoped, tag = 'input window, operand 2, single buffered']
    #allocation5 [shape = 's32[1]{0}', space=sflag, size = 0x4, scoped, tag = 'scoped memory for forward.1']
    #allocation6 [shape = 'u8[393216]{0}', space=vmem, size = 0x60000, scoped, tag = 'input window, operand 3, single buffered']
    #allocation7 [shape = 'u8[393216]{0}', space=vmem, size = 0x60000, scoped, tag = 'input window, operand 4, single buffered']
    #allocation8 [shape = 's32[1]{0}', space=sflag, size = 0x4, scoped, tag = 'scoped memory for forward.1']
    #allocation9 [shape = 'u8[32768]{0}', space=vmem, size = 0x8000, scoped, tag = 'input window, operand 5, single buffered']
    %11 = vsyncpa [#allocation3], 0
    %12 = vsyncpa [#allocation5], 0
    %13 = vsyncpa [#allocation8], 0
    // Predicated region
    $region2: #{forward.1} parent=1 // pred_check
      _
    $region3: #{forward.1} parent=1 // pred_check_branch
      %15 = sbr.rel (0) target = $region5
    $region4: #{forward.1} parent=1 // pred_region
      _
    $region5: #{forward.1} parent=1 // pred_fallthru
      _
    // Predicated region
    $region6: #{forward.1} parent=1 // pred_check
      _
    $region7: #{forward.1} parent=1 // pred_check_branch
      %17 = sbr.rel (0) target = $region9
    $region8: #{forward.1} parent=1 // pred_region
      %s19 = ssub.s32 1024, 1024
      %20 = vsyncadd [#allocation3], %s19
      %s21 = sshll.u32 [#allocation2], 4
      %s22 = int_to_ptr.vmem [resolvable:$true] %s21
      %27 = dma.hbm_to_vmem [thread:$0]  %s1, 1024, %s22, [#allocation3], 64, 64, 4
    $region9: #{forward.1} parent=1 // pred_fallthru
      _
    // Predicated region
    $region10: #{forward.1} parent=1 // pred_check
      _
    $region11: #{forward.1} parent=1 // pred_check_branch
      %29 = sbr.rel (0) target = $region13
    $region12: #{forward.1} parent=1 // pred_region
      %s31 = ssub.s32 3072, 3072
      %32 = vsyncadd [#allocation5], %s31
      %s33 = sshll.u32 [#allocation4], 4
      %s34 = int_to_ptr.vmem [resolvable:$true] %s33
      %39 = dma.hbm_to_vmem [thread:$0]  %s2, 3072, %s34, [#allocation5], 64, 64, 4
    $region13: #{forward.1} parent=1 // pred_fallthru
      _
    // Predicated region
    $region14: #{forward.1} parent=1 // pred_check
      _
    $region15: #{forward.1} parent=1 // pred_check_branch
      %41 = sbr.rel (0) target = $region17
    $region16: #{forward.1} parent=1 // pred_region
      %s43 = ssub.s32 12288, 12288
      %44 = vsyncadd [#allocation5], %s43
      %s45 = sshll.u32 [#allocation6], 4
      %s46 = int_to_ptr.vmem [resolvable:$true] %s45
      %51 = dma.hbm_to_vmem [thread:$0]  %s3, 12288, %s46, [#allocation5], 256, 256, 16
    $region17: #{forward.1} parent=1 // pred_fallthru
      _
    // Predicated region
    $region18: #{forward.1} parent=1 // pred_check
      _
    $region19: #{forward.1} parent=1 // pred_check_branch
      %53 = sbr.rel (0) target = $region21
    $region20: #{forward.1} parent=1 // pred_region
      %s55 = ssub.s32 12288, 12288
      %56 = vsyncadd [#allocation8], %s55
      %s57 = sshll.u32 [#allocation7], 4
      %s58 = int_to_ptr.vmem [resolvable:$true] %s57
      %63 = dma.hbm_to_vmem [thread:$0]  %s4, 12288, %s58, [#allocation8], 64, 64, 4
    $region21: #{forward.1} parent=1 // pred_fallthru
      _
    // Predicated region
    $region22: #{forward.1} parent=1 // pred_check
      _
    $region23: #{forward.1} parent=1 // pred_check_branch
      %65 = sbr.rel (0) target = $region25
    $region24: #{forward.1} parent=1 // pred_region
      %s67 = ssub.s32 1024, 1024
      %68 = vsyncadd [#allocation8], %s67
      %s69 = sshll.u32 [#allocation9], 4
      %s70 = int_to_ptr.vmem [resolvable:$true] %s69
      %75 = dma.hbm_to_vmem [thread:$0]  %s5, 1024, %s70, [#allocation8], 512, 512, 32
    $region25: #{forward.1} parent=1 // pred_fallthru
      _
    // Predicated region
    $region26: #{forward.1} parent=1 // pred_check
      _
    $region27: #{forward.1} parent=1 // pred_check_branch
      %77 = sbr.rel (0) target = $region29
    $region28: #{forward.1} parent=1 // pred_region
      %78 = dma.done [#allocation3], 1024
    $region29: #{forward.1} parent=1 // pred_fallthru
      _
    // Predicated region
    $region30: #{forward.1} parent=1 // pred_check
      _
    $region31: #{forward.1} parent=1 // pred_check_branch
      %80 = sbr.rel (0) target = $region33
    $region32: #{forward.1} parent=1 // pred_region
      %81 = dma.done [#allocation5], 3072
    $region33: #{forward.1} parent=1 // pred_fallthru
      _
    // Predicated region
    $region34: #{forward.1} parent=1 // pred_check
      _
    $region35: #{forward.1} parent=1 // pred_check_branch
      %83 = sbr.rel (0) target = $region37
    $region36: #{forward.1} parent=1 // pred_region
      %84 = dma.done [#allocation5], 12288
    $region37: #{forward.1} parent=1 // pred_fallthru
      _
    // Predicated region
    $region38: #{forward.1} parent=1 // pred_check
      _
    $region39: #{forward.1} parent=1 // pred_check_branch
      %86 = sbr.rel (0) target = $region41
    $region40: #{forward.1} parent=1 // pred_region
      %87 = dma.done [#allocation8], 12288
    $region41: #{forward.1} parent=1 // pred_fallthru
      _
    // Predicated region
    $region42: #{forward.1} parent=1 // pred_check
      _
    $region43: #{forward.1} parent=1 // pred_check_branch
      %89 = sbr.rel (0) target = $region45
    $region44: #{forward.1} parent=1 // pred_region
      %90 = dma.done [#allocation8], 1024
    $region45: #{forward.1} parent=1 // pred_fallthru
      _
    %v92 = vld [vmem:[%s0] sm:$0xff]
    %v93 = vld [vmem:[#allocation2] sm:$0xf]
    %v94 = vld [vmem:[#allocation2 + $0x4] sm:$0xf]
    %v95 = vld [vmem:[#allocation2 + $0x8] sm:$0xf]
    %v96 = vld [vmem:[#allocation2 + $0xc] sm:$0xf]
    %v97 = vld [vmem:[#allocation2 + $0x10] sm:$0xf]
    %v98 = vld [vmem:[#allocation2 + $0x14] sm:$0xf]
    %v99 = vld [vmem:[#allocation2 + $0x18] sm:$0xf]
    %v100 = vld [vmem:[#allocation2 + $0x1c] sm:$0xf]
    %v101 = vld [vmem:[#allocation2 + $0x20] sm:$0xf]
    %v102 = vld [vmem:[#allocation2 + $0x24] sm:$0xf]
    %v103 = vld [vmem:[#allocation2 + $0x28] sm:$0xf]
    %v104 = vld [vmem:[#allocation2 + $0x2c] sm:$0xf]
    %v105 = vld [vmem:[#allocation2 + $0x30] sm:$0xf]
    %v106 = vld [vmem:[#allocation2 + $0x34] sm:$0xf]
    %v107 = vld [vmem:[#allocation2 + $0x38] sm:$0xf]
    %v108 = vld [vmem:[#allocation2 + $0x3c] sm:$0xf]
    %v109 = vpack.c.bf16 %v92, %v92
    %v110 = vld [vmem:[#allocation9] ss:$0 sm:$0xff]
    %v127 = vunpack.c.l.b16 %v93
    %v128 = vunpack.c.l.b16 %v94
    %v129 = vunpack.c.l.b16 %v95
    %v130 = vunpack.c.l.b16 %v96
    %v131 = vunpack.c.l.b16 %v97
    %v132 = vunpack.c.l.b16 %v98
    %v133 = vunpack.c.l.b16 %v99
    %v134 = vunpack.c.l.b16 %v100
    %v135 = vunpack.c.l.b16 %v101
    %v136 = vunpack.c.l.b16 %v102
    %v137 = vunpack.c.l.b16 %v103
    %v138 = vunpack.c.l.b16 %v104
    %v139 = vunpack.c.l.b16 %v105
    %v140 = vunpack.c.l.b16 %v106
    %v141 = vunpack.c.l.b16 %v107
    %v142 = vunpack.c.l.b16 %v108
    %v143 = vpack.c.b16 %v128, %v127
    %v144 = vpack.c.b16 %v130, %v129
    %v145 = vpack.c.b16 %v132, %v131
    %v146 = vpack.c.b16 %v134, %v133
    %v147 = vpack.c.b16 %v136, %v135
    %v148 = vpack.c.b16 %v138, %v137
    %v149 = vpack.c.b16 %v140, %v139
    %v150 = vpack.c.b16 %v142, %v141
    %159 = vmatprep.subr.bf16.mxu0 0
    %160 = vmatpush1.bf16.msra.mxu0 %v150
    %161 = vmatprep.subr.bf16.mxu0 0
    %162 = vmatpush1.bf16.msra.mxu0 %v149
    %163 = vmatprep.subr.bf16.mxu0 0
    %164 = vmatpush1.bf16.msra.mxu0 %v148
    %165 = vmatprep.subr.bf16.mxu0 0
    %166 = vmatpush1.bf16.msra.mxu0 %v147
    %167 = vmatprep.subr.bf16.mxu0 0
    %168 = vmatpush1.bf16.msra.mxu0 %v146
    %169 = vmatprep.subr.bf16.mxu0 0
    %170 = vmatpush1.bf16.msra.mxu0 %v145
    %171 = vmatprep.subr.bf16.mxu0 0
    %172 = vmatpush1.bf16.msra.mxu0 %v144
    %173 = vmatprep.subr.bf16.mxu0 0
    %174 = vmatpush1.bf16.msra.mxu0 %v143
    %175 = vmatprep.subr.bf16.mxu0 0
    %176 = vmatpush2.bf16.msra.mxu0 0
    %177 = vmatprep.subr.bf16.mxu0 0
    %178 = vmatpush2.bf16.msra.mxu0 0
    %179 = vmatprep.subr.bf16.mxu0 0
    %180 = vmatpush2.bf16.msra.mxu0 0
    %181 = vmatprep.subr.bf16.mxu0 0
    %182 = vmatpush2.bf16.msra.mxu0 0
    %183 = vmatprep.subr.bf16.mxu0 0
    %184 = vmatpush2.bf16.msra.mxu0 0
    %185 = vmatprep.subr.bf16.mxu0 0
    %186 = vmatpush2.bf16.msra.mxu0 0
    %187 = vmatprep.subr.bf16.mxu0 0
    %188 = vmatpush2.bf16.msra.mxu0 0
    %189 = vmatprep.subr.bf16.mxu0 0
    %190 = vmatpush2.bf16.msra.mxu0 0
    %191 = vmatprep.mubr.bf16.mxu0 0
    %192 = vmatmul.mubr.bf16.gmra.mxu0 %v109
    %v193 = vpop.f32.mrf.mxu0
    %v194 = vadd.f32 %v110, %v193
    %v195 = vpop.f32.mrf.mxu0
    %v196 = vpop.f32.mrf.mxu0
    %v197 = vpop.f32.mrf.mxu0
    %198 = vdwg.mxu0
    %v199 = vmax.f32 %v194, 0.0
    %v200 = vld [vmem:[#allocation6] sm:$0xff]
    %v201 = vld [vmem:[#allocation6 + $0x8] sm:$0xff]
    %v202 = vld [vmem:[#allocation6 + $0x10] sm:$0xff]
    %v203 = vld [vmem:[#allocation6 + $0x18] sm:$0xff]
    %v204 = vld [vmem:[#allocation6 + $0x20] sm:$0xff]
    %v205 = vld [vmem:[#allocation6 + $0x28] sm:$0xff]
    %v206 = vld [vmem:[#allocation6 + $0x30] sm:$0xff]
    %v207 = vld [vmem:[#allocation6 + $0x38] sm:$0xff]
    %v208 = vld [vmem:[#allocation6 + $0x40] sm:$0xff]
    %v209 = vld [vmem:[#allocation6 + $0x48] sm:$0xff]
    %v210 = vld [vmem:[#allocation6 + $0x50] sm:$0xff]
    %v211 = vld [vmem:[#allocation6 + $0x58] sm:$0xff]
    %v212 = vld [vmem:[#allocation6 + $0x60] sm:$0xff]
    %v213 = vld [vmem:[#allocation6 + $0x68] sm:$0xff]
    %v214 = vld [vmem:[#allocation6 + $0x70] sm:$0xff]
    %v215 = vld [vmem:[#allocation6 + $0x78] sm:$0xff]
    %v216 = vld [vmem:[#allocation6 + $0x80] sm:$0xff]
    %v217 = vld [vmem:[#allocation6 + $0x88] sm:$0xff]
    %v218 = vld [vmem:[#allocation6 + $0x90] sm:$0xff]
    %v219 = vld [vmem:[#allocation6 + $0x98] sm:$0xff]
    %v220 = vld [vmem:[#allocation6 + $0xa0] sm:$0xff]
    %v221 = vld [vmem:[#allocation6 + $0xa8] sm:$0xff]
    %v222 = vld [vmem:[#allocation6 + $0xb0] sm:$0xff]
    %v223 = vld [vmem:[#allocation6 + $0xb8] sm:$0xff]
    %v224 = vld [vmem:[#allocation6 + $0xc0] sm:$0xff]
    %v225 = vld [vmem:[#allocation6 + $0xc8] sm:$0xff]
    %v226 = vld [vmem:[#allocation6 + $0xd0] sm:$0xff]
    %v227 = vld [vmem:[#allocation6 + $0xd8] sm:$0xff]
    %v228 = vld [vmem:[#allocation6 + $0xe0] sm:$0xff]
    %v229 = vld [vmem:[#allocation6 + $0xe8] sm:$0xff]
    %v230 = vld [vmem:[#allocation6 + $0xf0] sm:$0xff]
    %v231 = vld [vmem:[#allocation6 + $0xf8] sm:$0xff]
    %v232 = vpack.c.bf16 %v199, %v199
    %s233 = scalar_lea.vmem [#allocation9], 3
    %v234 = vld [vmem:[%s233] ss:$8 sm:$0xf]
    %v236 = vlaneseq
    %v237 = vshrl.u32 %v236, 7
    %v238 = vsub.s32 0, %v237
    %v239 = vrot.slane %v234, %v238
    %v240 = vlaneseq
    %v241 = vshrl.u32 %v240, 7
    %v242 = vsub.s32 1, %v241
    %v243 = vrot.slane %v234, %v242
    %v244 = vlaneseq
    %v245 = vshrl.u32 %v244, 7
    %v246 = vsub.s32 2, %v245
    %v247 = vrot.slane %v234, %v246
    %v248 = vlaneseq
    %v249 = vshrl.u32 %v248, 7
    %v250 = vsub.s32 3, %v249
    %v251 = vrot.slane %v234, %v250
    %v288 = vunpack.c.l.b16 %v200
    %v289 = vunpack.c.h.b16 %v200
    %v290 = vunpack.c.l.b16 %v201
    %v291 = vunpack.c.h.b16 %v201
    %v292 = vunpack.c.l.b16 %v202
    %v293 = vunpack.c.h.b16 %v202
    %v294 = vunpack.c.l.b16 %v203
    %v295 = vunpack.c.h.b16 %v203
    %v296 = vunpack.c.l.b16 %v204
    %v297 = vunpack.c.h.b16 %v204
    %v298 = vunpack.c.l.b16 %v205
    %v299 = vunpack.c.h.b16 %v205
    %v300 = vunpack.c.l.b16 %v206
    %v301 = vunpack.c.h.b16 %v206
    %v302 = vunpack.c.l.b16 %v207
    %v303 = vunpack.c.h.b16 %v207
    %v304 = vunpack.c.l.b16 %v208
    %v305 = vunpack.c.h.b16 %v208
    %v306 = vunpack.c.l.b16 %v209
    %v307 = vunpack.c.h.b16 %v209
    %v308 = vunpack.c.l.b16 %v210
    %v309 = vunpack.c.h.b16 %v210
    %v310 = vunpack.c.l.b16 %v211
    %v311 = vunpack.c.h.b16 %v211
    %v312 = vunpack.c.l.b16 %v212
    %v313 = vunpack.c.h.b16 %v212
    %v314 = vunpack.c.l.b16 %v213
    %v315 = vunpack.c.h.b16 %v213
    %v316 = vunpack.c.l.b16 %v214
    %v317 = vunpack.c.h.b16 %v214
    %v318 = vunpack.c.l.b16 %v215
    %v319 = vunpack.c.h.b16 %v215
    %v320 = vunpack.c.l.b16 %v216
    %v321 = vunpack.c.h.b16 %v216
    %v322 = vunpack.c.l.b16 %v217
    %v323 = vunpack.c.h.b16 %v217
    %v324 = vunpack.c.l.b16 %v218
    %v325 = vunpack.c.h.b16 %v218
    %v326 = vunpack.c.l.b16 %v219
    %v327 = vunpack.c.h.b16 %v219
    %v328 = vunpack.c.l.b16 %v220
    %v329 = vunpack.c.h.b16 %v220
    %v330 = vunpack.c.l.b16 %v221
    %v331 = vunpack.c.h.b16 %v221
    %v332 = vunpack.c.l.b16 %v222
    %v333 = vunpack.c.h.b16 %v222
    %v334 = vunpack.c.l.b16 %v223
    %v335 = vunpack.c.h.b16 %v223
    %v336 = vunpack.c.l.b16 %v224
    %v337 = vunpack.c.h.b16 %v224
    %v338 = vunpack.c.l.b16 %v225
    %v339 = vunpack.c.h.b16 %v225
    %v340 = vunpack.c.l.b16 %v226
    %v341 = vunpack.c.h.b16 %v226
    %v342 = vunpack.c.l.b16 %v227
    %v343 = vunpack.c.h.b16 %v227
    %v344 = vunpack.c.l.b16 %v228
    %v345 = vunpack.c.h.b16 %v228
    %v346 = vunpack.c.l.b16 %v229
    %v347 = vunpack.c.h.b16 %v229
    %v348 = vunpack.c.l.b16 %v230
    %v349 = vunpack.c.h.b16 %v230
    %v350 = vunpack.c.l.b16 %v231
    %v351 = vunpack.c.h.b16 %v231
    %v352 = vpack.c.b16 %v292, %v288
    %v353 = vpack.c.b16 %v293, %v289
    %v354 = vpack.c.b16 %v294, %v290
    %v355 = vpack.c.b16 %v295, %v291
    %v356 = vpack.c.b16 %v300, %v296
    %v357 = vpack.c.b16 %v301, %v297
    %v358 = vpack.c.b16 %v302, %v298
    %v359 = vpack.c.b16 %v303, %v299
    %v360 = vpack.c.b16 %v308, %v304
    %v361 = vpack.c.b16 %v309, %v305
    %v362 = vpack.c.b16 %v310, %v306
    %v363 = vpack.c.b16 %v311, %v307
    %v364 = vpack.c.b16 %v316, %v312
    %v365 = vpack.c.b16 %v317, %v313
    %v366 = vpack.c.b16 %v318, %v314
    %v367 = vpack.c.b16 %v319, %v315
    %v368 = vpack.c.b16 %v324, %v320
    %v369 = vpack.c.b16 %v325, %v321
    %v370 = vpack.c.b16 %v326, %v322
    %v371 = vpack.c.b16 %v327, %v323
    %v372 = vpack.c.b16 %v332, %v328
    %v373 = vpack.c.b16 %v333, %v329
    %v374 = vpack.c.b16 %v334, %v330
    %v375 = vpack.c.b16 %v335, %v331
    %v376 = vpack.c.b16 %v340, %v336
    %v377 = vpack.c.b16 %v341, %v337
    %v378 = vpack.c.b16 %v342, %v338
    %v379 = vpack.c.b16 %v343, %v339
    %v380 = vpack.c.b16 %v348, %v344
    %v381 = vpack.c.b16 %v349, %v345
    %v382 = vpack.c.b16 %v350, %v346
    %v383 = vpack.c.b16 %v351, %v347
    %416 = vmatprep.subr.bf16.mxu0 %v381
    %417 = vmatpush1.bf16.msra.mxu0 %v380
    %418 = vmatprep.subr.bf16.mxu0 %v377
    %419 = vmatpush1.bf16.msra.mxu0 %v376
    %420 = vmatprep.subr.bf16.mxu0 %v373
    %421 = vmatpush1.bf16.msra.mxu0 %v372
    %422 = vmatprep.subr.bf16.mxu0 %v369
    %423 = vmatpush1.bf16.msra.mxu0 %v368
    %424 = vmatprep.subr.bf16.mxu0 %v365
    %425 = vmatpush1.bf16.msra.mxu0 %v364
    %426 = vmatprep.subr.bf16.mxu0 %v361
    %427 = vmatpush1.bf16.msra.mxu0 %v360
    %428 = vmatprep.subr.bf16.mxu0 %v357
    %429 = vmatpush1.bf16.msra.mxu0 %v356
    %430 = vmatprep.subr.bf16.mxu0 %v353
    %431 = vmatpush1.bf16.msra.mxu0 %v352
    %432 = vmatprep.subr.bf16.mxu0 0
    %433 = vmatpush2.bf16.msra.mxu0 0
    %434 = vmatprep.subr.bf16.mxu0 0
    %435 = vmatpush2.bf16.msra.mxu0 0
    %436 = vmatprep.subr.bf16.mxu0 0
    %437 = vmatpush2.bf16.msra.mxu0 0
    %438 = vmatprep.subr.bf16.mxu0 0
    %439 = vmatpush2.bf16.msra.mxu0 0
    %440 = vmatprep.subr.bf16.mxu0 0
    %441 = vmatpush2.bf16.msra.mxu0 0
    %442 = vmatprep.subr.bf16.mxu0 0
    %443 = vmatpush2.bf16.msra.mxu0 0
    %444 = vmatprep.subr.bf16.mxu0 0
    %445 = vmatpush2.bf16.msra.mxu0 0
    %446 = vmatprep.subr.bf16.mxu0 0
    %447 = vmatpush2.bf16.msra.mxu0 0
    %448 = vmatprep.mubr.bf16.mxu0 0
    %449 = vmatmul.mubr.bf16.gmra.mxu0 %v232
    %v450 = vpop.f32.mrf.mxu0
    %v451 = vadd.f32 %v239, %v450
    %v452 = vpop.f32.mrf.mxu0
    %v453 = vadd.f32 %v243, %v452
    %v454 = vpop.f32.mrf.mxu0
    %v455 = vpop.f32.mrf.mxu0
    %456 = vdwg.mxu0
    %457 = vmatprep.subr.bf16.mxu0 %v383
    %458 = vmatpush1.bf16.msra.mxu0 %v382
    %459 = vmatprep.subr.bf16.mxu0 %v379
    %460 = vmatpush1.bf16.msra.mxu0 %v378
    %461 = vmatprep.subr.bf16.mxu0 %v375
    %462 = vmatpush1.bf16.msra.mxu0 %v374
    %463 = vmatprep.subr.bf16.mxu0 %v371
    %464 = vmatpush1.bf16.msra.mxu0 %v370
    %465 = vmatprep.subr.bf16.mxu0 %v367
    %466 = vmatpush1.bf16.msra.mxu0 %v366
    %467 = vmatprep.subr.bf16.mxu0 %v363
    %468 = vmatpush1.bf16.msra.mxu0 %v362
    %469 = vmatprep.subr.bf16.mxu0 %v359
    %470 = vmatpush1.bf16.msra.mxu0 %v358
    %471 = vmatprep.subr.bf16.mxu0 %v355
    %472 = vmatpush1.bf16.msra.mxu0 %v354
    %473 = vmatprep.subr.bf16.mxu0 0
    %474 = vmatpush2.bf16.msra.mxu0 0
    %475 = vmatprep.subr.bf16.mxu0 0
    %476 = vmatpush2.bf16.msra.mxu0 0
    %477 = vmatprep.subr.bf16.mxu0 0
    %478 = vmatpush2.bf16.msra.mxu0 0
    %479 = vmatprep.subr.bf16.mxu0 0
    %480 = vmatpush2.bf16.msra.mxu0 0
    %481 = vmatprep.subr.bf16.mxu0 0
    %482 = vmatpush2.bf16.msra.mxu0 0
    %483 = vmatprep.subr.bf16.mxu0 0
    %484 = vmatpush2.bf16.msra.mxu0 0
    %485 = vmatprep.subr.bf16.mxu0 0
    %486 = vmatpush2.bf16.msra.mxu0 0
    %487 = vmatprep.subr.bf16.mxu0 0
    %488 = vmatpush2.bf16.msra.mxu0 0
    %489 = vmatprep.mubr.bf16.mxu0 0
    %490 = vmatmul.mubr.bf16.gmra.mxu0 %v232
    %v491 = vpop.f32.mrf.mxu0
    %v492 = vadd.f32 %v247, %v491
    %v493 = vpop.f32.mrf.mxu0
    %v494 = vadd.f32 %v251, %v493
    %v495 = vpop.f32.mrf.mxu0
    %v496 = vpop.f32.mrf.mxu0
    %497 = vdwg.mxu0
    %v498 = vld [vmem:[#allocation7] sm:$0xf]
    %v499 = vld [vmem:[#allocation7 + $0x4] sm:$0xf]
    %v500 = vld [vmem:[#allocation7 + $0x8] sm:$0xf]
    %v501 = vld [vmem:[#allocation7 + $0xc] sm:$0xf]
    %v502 = vld [vmem:[#allocation7 + $0x10] sm:$0xf]
    %v503 = vld [vmem:[#allocation7 + $0x14] sm:$0xf]
    %v504 = vld [vmem:[#allocation7 + $0x18] sm:$0xf]
    %v505 = vld [vmem:[#allocation7 + $0x1c] sm:$0xf]
    %v506 = vld [vmem:[#allocation7 + $0x20] sm:$0xf]
    %v507 = vld [vmem:[#allocation7 + $0x24] sm:$0xf]
    %v508 = vld [vmem:[#allocation7 + $0x28] sm:$0xf]
    %v509 = vld [vmem:[#allocation7 + $0x2c] sm:$0xf]
    %v510 = vld [vmem:[#allocation7 + $0x30] sm:$0xf]
    %v511 = vld [vmem:[#allocation7 + $0x34] sm:$0xf]
    %v512 = vld [vmem:[#allocation7 + $0x38] sm:$0xf]
    %v513 = vld [vmem:[#allocation7 + $0x3c] sm:$0xf]
    %v514 = vld [vmem:[#allocation7 + $0x40] sm:$0xf]
    %v515 = vld [vmem:[#allocation7 + $0x44] sm:$0xf]
    %v516 = vld [vmem:[#allocation7 + $0x48] sm:$0xf]
    %v517 = vld [vmem:[#allocation7 + $0x4c] sm:$0xf]
    %v518 = vld [vmem:[#allocation7 + $0x50] sm:$0xf]
    %v519 = vld [vmem:[#allocation7 + $0x54] sm:$0xf]
    %v520 = vld [vmem:[#allocation7 + $0x58] sm:$0xf]
    %v521 = vld [vmem:[#allocation7 + $0x5c] sm:$0xf]
    %v522 = vld [vmem:[#allocation7 + $0x60] sm:$0xf]
    %v523 = vld [vmem:[#allocation7 + $0x64] sm:$0xf]
    %v524 = vld [vmem:[#allocation7 + $0x68] sm:$0xf]
    %v525 = vld [vmem:[#allocation7 + $0x6c] sm:$0xf]
    %v526 = vld [vmem:[#allocation7 + $0x70] sm:$0xf]
    %v527 = vld [vmem:[#allocation7 + $0x74] sm:$0xf]
    %v528 = vld [vmem:[#allocation7 + $0x78] sm:$0xf]
    %v529 = vld [vmem:[#allocation7 + $0x7c] sm:$0xf]
    %v530 = vld [vmem:[#allocation7 + $0x80] sm:$0xf]
    %v531 = vld [vmem:[#allocation7 + $0x84] sm:$0xf]
    %v532 = vld [vmem:[#allocation7 + $0x88] sm:$0xf]
    %v533 = vld [vmem:[#allocation7 + $0x8c] sm:$0xf]
    %v534 = vld [vmem:[#allocation7 + $0x90] sm:$0xf]
    %v535 = vld [vmem:[#allocation7 + $0x94] sm:$0xf]
    %v536 = vld [vmem:[#allocation7 + $0x98] sm:$0xf]
    %v537 = vld [vmem:[#allocation7 + $0x9c] sm:$0xf]
    %v538 = vld [vmem:[#allocation7 + $0xa0] sm:$0xf]
    %v539 = vld [vmem:[#allocation7 + $0xa4] sm:$0xf]
    %v540 = vld [vmem:[#allocation7 + $0xa8] sm:$0xf]
    %v541 = vld [vmem:[#allocation7 + $0xac] sm:$0xf]
    %v542 = vld [vmem:[#allocation7 + $0xb0] sm:$0xf]
    %v543 = vld [vmem:[#allocation7 + $0xb4] sm:$0xf]
    %v544 = vld [vmem:[#allocation7 + $0xb8] sm:$0xf]
    %v545 = vld [vmem:[#allocation7 + $0xbc] sm:$0xf]
    %v546 = vld [vmem:[#allocation7 + $0xc0] sm:$0xf]
    %v547 = vld [vmem:[#allocation7 + $0xc4] sm:$0xf]
    %v548 = vld [vmem:[#allocation7 + $0xc8] sm:$0xf]
    %v549 = vld [vmem:[#allocation7 + $0xcc] sm:$0xf]
    %v550 = vld [vmem:[#allocation7 + $0xd0] sm:$0xf]
    %v551 = vld [vmem:[#allocation7 + $0xd4] sm:$0xf]
    %v552 = vld [vmem:[#allocation7 + $0xd8] sm:$0xf]
    %v553 = vld [vmem:[#allocation7 + $0xdc] sm:$0xf]
    %v554 = vld [vmem:[#allocation7 + $0xe0] sm:$0xf]
    %v555 = vld [vmem:[#allocation7 + $0xe4] sm:$0xf]
    %v556 = vld [vmem:[#allocation7 + $0xe8] sm:$0xf]
    %v557 = vld [vmem:[#allocation7 + $0xec] sm:$0xf]
    %v558 = vld [vmem:[#allocation7 + $0xf0] sm:$0xf]
    %v559 = vld [vmem:[#allocation7 + $0xf4] sm:$0xf]
    %v560 = vld [vmem:[#allocation7 + $0xf8] sm:$0xf]
    %v561 = vld [vmem:[#allocation7 + $0xfc] sm:$0xf]
    %v562 = vpack.c.bf16 %v451, %v451
    %v563 = vpack.c.bf16 %v453, %v453
    %v564 = vpack.c.bf16 %v492, %v492
    %v565 = vpack.c.bf16 %v494, %v494
    %v566 = vld [vmem:[#allocation9 + $0x4] ss:$0 sm:$0xff]
    %v631 = vunpack.c.l.b16 %v498
    %v632 = vunpack.c.l.b16 %v499
    %v633 = vunpack.c.l.b16 %v500
    %v634 = vunpack.c.l.b16 %v501
    %v635 = vunpack.c.l.b16 %v502
    %v636 = vunpack.c.l.b16 %v503
    %v637 = vunpack.c.l.b16 %v504
    %v638 = vunpack.c.l.b16 %v505
    %v639 = vunpack.c.l.b16 %v506
    %v640 = vunpack.c.l.b16 %v507
    %v641 = vunpack.c.l.b16 %v508
    %v642 = vunpack.c.l.b16 %v509
    %v643 = vunpack.c.l.b16 %v510
    %v644 = vunpack.c.l.b16 %v511
    %v645 = vunpack.c.l.b16 %v512
    %v646 = vunpack.c.l.b16 %v513
    %v647 = vunpack.c.l.b16 %v514
    %v648 = vunpack.c.l.b16 %v515
    %v649 = vunpack.c.l.b16 %v516
    %v650 = vunpack.c.l.b16 %v517
    %v651 = vunpack.c.l.b16 %v518
    %v652 = vunpack.c.l.b16 %v519
    %v653 = vunpack.c.l.b16 %v520
    %v654 = vunpack.c.l.b16 %v521
    %v655 = vunpack.c.l.b16 %v522
    %v656 = vunpack.c.l.b16 %v523
    %v657 = vunpack.c.l.b16 %v524
    %v658 = vunpack.c.l.b16 %v525
    %v659 = vunpack.c.l.b16 %v526
    %v660 = vunpack.c.l.b16 %v527
    %v661 = vunpack.c.l.b16 %v528
    %v662 = vunpack.c.l.b16 %v529
    %v663 = vunpack.c.l.b16 %v530
    %v664 = vunpack.c.l.b16 %v531
    %v665 = vunpack.c.l.b16 %v532
    %v666 = vunpack.c.l.b16 %v533
    %v667 = vunpack.c.l.b16 %v534
    %v668 = vunpack.c.l.b16 %v535
    %v669 = vunpack.c.l.b16 %v536
    %v670 = vunpack.c.l.b16 %v537
    %v671 = vunpack.c.l.b16 %v538
    %v672 = vunpack.c.l.b16 %v539
    %v673 = vunpack.c.l.b16 %v540
    %v674 = vunpack.c.l.b16 %v541
    %v675 = vunpack.c.l.b16 %v542
    %v676 = vunpack.c.l.b16 %v543
    %v677 = vunpack.c.l.b16 %v544
    %v678 = vunpack.c.l.b16 %v545
    %v679 = vunpack.c.l.b16 %v546
    %v680 = vunpack.c.l.b16 %v547
    %v681 = vunpack.c.l.b16 %v548
    %v682 = vunpack.c.l.b16 %v549
    %v683 = vunpack.c.l.b16 %v550
    %v684 = vunpack.c.l.b16 %v551
    %v685 = vunpack.c.l.b16 %v552
    %v686 = vunpack.c.l.b16 %v553
    %v687 = vunpack.c.l.b16 %v554
    %v688 = vunpack.c.l.b16 %v555
    %v689 = vunpack.c.l.b16 %v556
    %v690 = vunpack.c.l.b16 %v557
    %v691 = vunpack.c.l.b16 %v558
    %v692 = vunpack.c.l.b16 %v559
    %v693 = vunpack.c.l.b16 %v560
    %v694 = vunpack.c.l.b16 %v561
    %v695 = vpack.c.b16 %v632, %v631
    %v696 = vpack.c.b16 %v634, %v633
    %v697 = vpack.c.b16 %v636, %v635
    %v698 = vpack.c.b16 %v638, %v637
    %v699 = vpack.c.b16 %v640, %v639
    %v700 = vpack.c.b16 %v642, %v641
    %v701 = vpack.c.b16 %v644, %v643
    %v702 = vpack.c.b16 %v646, %v645
    %v703 = vpack.c.b16 %v648, %v647
    %v704 = vpack.c.b16 %v650, %v649
    %v705 = vpack.c.b16 %v652, %v651
    %v706 = vpack.c.b16 %v654, %v653
    %v707 = vpack.c.b16 %v656, %v655
    %v708 = vpack.c.b16 %v658, %v657
    %v709 = vpack.c.b16 %v660, %v659
    %v710 = vpack.c.b16 %v662, %v661
    %v711 = vpack.c.b16 %v664, %v663
    %v712 = vpack.c.b16 %v666, %v665
    %v713 = vpack.c.b16 %v668, %v667
    %v714 = vpack.c.b16 %v670, %v669
    %v715 = vpack.c.b16 %v672, %v671
    %v716 = vpack.c.b16 %v674, %v673
    %v717 = vpack.c.b16 %v676, %v675
    %v718 = vpack.c.b16 %v678, %v677
    %v719 = vpack.c.b16 %v680, %v679
    %v720 = vpack.c.b16 %v682, %v681
    %v721 = vpack.c.b16 %v684, %v683
    %v722 = vpack.c.b16 %v686, %v685
    %v723 = vpack.c.b16 %v688, %v687
    %v724 = vpack.c.b16 %v690, %v689
    %v725 = vpack.c.b16 %v692, %v691
    %v726 = vpack.c.b16 %v694, %v693
    %759 = vmatprep.subr.bf16.mxu0 0
    %760 = vmatpush1.bf16.msra.mxu0 %v702
    %761 = vmatprep.subr.bf16.mxu0 0
    %762 = vmatpush1.bf16.msra.mxu0 %v701
    %763 = vmatprep.subr.bf16.mxu0 0
    %764 = vmatpush1.bf16.msra.mxu0 %v700
    %765 = vmatprep.subr.bf16.mxu0 0
    %766 = vmatpush1.bf16.msra.mxu0 %v699
    %767 = vmatprep.subr.bf16.mxu0 0
    %768 = vmatpush1.bf16.msra.mxu0 %v698
    %769 = vmatprep.subr.bf16.mxu0 0
    %770 = vmatpush1.bf16.msra.mxu0 %v697
    %771 = vmatprep.subr.bf16.mxu0 0
    %772 = vmatpush1.bf16.msra.mxu0 %v696
    %773 = vmatprep.subr.bf16.mxu0 0
    %774 = vmatpush1.bf16.msra.mxu0 %v695
    %775 = vmatprep.subr.bf16.mxu0 0
    %776 = vmatpush2.bf16.msra.mxu0 %v710
    %777 = vmatprep.subr.bf16.mxu0 0
    %778 = vmatpush2.bf16.msra.mxu0 %v709
    %779 = vmatprep.subr.bf16.mxu0 0
    %780 = vmatpush2.bf16.msra.mxu0 %v708
    %781 = vmatprep.subr.bf16.mxu0 0
    %782 = vmatpush2.bf16.msra.mxu0 %v707
    %783 = vmatprep.subr.bf16.mxu0 0
    %784 = vmatpush2.bf16.msra.mxu0 %v706
    %785 = vmatprep.subr.bf16.mxu0 0
    %786 = vmatpush2.bf16.msra.mxu0 %v705
    %787 = vmatprep.subr.bf16.mxu0 0
    %788 = vmatpush2.bf16.msra.mxu0 %v704
    %789 = vmatprep.subr.bf16.mxu0 0
    %790 = vmatpush2.bf16.msra.mxu0 %v703
    %791 = vmatprep.mubr.bf16.mxu0 %v563
    %792 = vmatmul.mubr.bf16.gmra.mxu0 %v562
    %v793 = vpop.f32.mrf.mxu0
    %v794 = vadd.f32 %v566, %v793
    %v795 = vpop.f32.mrf.mxu0
    %v796 = vpop.f32.mrf.mxu0
    %v797 = vpop.f32.mrf.mxu0
    %798 = vdwg.mxu0
    %799 = vmatprep.subr.bf16.mxu0 0
    %800 = vmatpush1.bf16.msra.mxu0 %v718
    %801 = vmatprep.subr.bf16.mxu0 0
    %802 = vmatpush1.bf16.msra.mxu0 %v717
    %803 = vmatprep.subr.bf16.mxu0 0
    %804 = vmatpush1.bf16.msra.mxu0 %v716
    %805 = vmatprep.subr.bf16.mxu0 0
    %806 = vmatpush1.bf16.msra.mxu0 %v715
    %807 = vmatprep.subr.bf16.mxu0 0
    %808 = vmatpush1.bf16.msra.mxu0 %v714
    %809 = vmatprep.subr.bf16.mxu0 0
    %810 = vmatpush1.bf16.msra.mxu0 %v713
    %811 = vmatprep.subr.bf16.mxu0 0
    %812 = vmatpush1.bf16.msra.mxu0 %v712
    %813 = vmatprep.subr.bf16.mxu0 0
    %814 = vmatpush1.bf16.msra.mxu0 %v711
    %815 = vmatprep.subr.bf16.mxu0 0
    %816 = vmatpush2.bf16.msra.mxu0 %v726
    %817 = vmatprep.subr.bf16.mxu0 0
    %818 = vmatpush2.bf16.msra.mxu0 %v725
    %819 = vmatprep.subr.bf16.mxu0 0
    %820 = vmatpush2.bf16.msra.mxu0 %v724
    %821 = vmatprep.subr.bf16.mxu0 0
    %822 = vmatpush2.bf16.msra.mxu0 %v723
    %823 = vmatprep.subr.bf16.mxu0 0
    %824 = vmatpush2.bf16.msra.mxu0 %v722
    %825 = vmatprep.subr.bf16.mxu0 0
    %826 = vmatpush2.bf16.msra.mxu0 %v721
    %827 = vmatprep.subr.bf16.mxu0 0
    %828 = vmatpush2.bf16.msra.mxu0 %v720
    %829 = vmatprep.subr.bf16.mxu0 0
    %830 = vmatpush2.bf16.msra.mxu0 %v719
    %831 = vmatprep.mubr.bf16.mxu0 %v565
    %832 = vmatmul.mubr.bf16.gmra.mxu0 %v564
    %v833 = vpop.f32.mrf.mxu0
    %v834 = vadd.f32 %v794, %v833
    %v835 = vpop.f32.mrf.mxu0
    %v836 = vpop.f32.mrf.mxu0
    %v837 = vpop.f32.mrf.mxu0
    %838 = vdwg.mxu0
    %839 = vst [vmem:[%s6] sm:$0xff] %v834
    %v840 = vld [vmem:[#allocation4] sm:$0xf]
    %v841 = vld [vmem:[#allocation4 + $0x4] sm:$0xf]
    %v842 = vld [vmem:[#allocation4 + $0x8] sm:$0xf]
    %v843 = vld [vmem:[#allocation4 + $0xc] sm:$0xf]
    %v844 = vld [vmem:[#allocation4 + $0x10] sm:$0xf]
    %v845 = vld [vmem:[#allocation4 + $0x14] sm:$0xf]
    %v846 = vld [vmem:[#allocation4 + $0x18] sm:$0xf]
    %v847 = vld [vmem:[#allocation4 + $0x1c] sm:$0xf]
    %v848 = vld [vmem:[#allocation4 + $0x20] sm:$0xf]
    %v849 = vld [vmem:[#allocation4 + $0x24] sm:$0xf]
    %v850 = vld [vmem:[#allocation4 + $0x28] sm:$0xf]
    %v851 = vld [vmem:[#allocation4 + $0x2c] sm:$0xf]
    %v852 = vld [vmem:[#allocation4 + $0x30] sm:$0xf]
    %v853 = vld [vmem:[#allocation4 + $0x34] sm:$0xf]
    %v854 = vld [vmem:[#allocation4 + $0x38] sm:$0xf]
    %v855 = vld [vmem:[#allocation4 + $0x3c] sm:$0xf]
    %v856 = vld [vmem:[#allocation9 + $0x1] ss:$0 sm:$0xff]
    %v873 = vunpack.c.l.b16 %v840
    %v874 = vunpack.c.l.b16 %v841
    %v875 = vunpack.c.l.b16 %v842
    %v876 = vunpack.c.l.b16 %v843
    %v877 = vunpack.c.l.b16 %v844
    %v878 = vunpack.c.l.b16 %v845
    %v879 = vunpack.c.l.b16 %v846
    %v880 = vunpack.c.l.b16 %v847
    %v881 = vunpack.c.l.b16 %v848
    %v882 = vunpack.c.l.b16 %v849
    %v883 = vunpack.c.l.b16 %v850
    %v884 = vunpack.c.l.b16 %v851
    %v885 = vunpack.c.l.b16 %v852
    %v886 = vunpack.c.l.b16 %v853
    %v887 = vunpack.c.l.b16 %v854
    %v888 = vunpack.c.l.b16 %v855
    %v889 = vpack.c.b16 %v874, %v873
    %v890 = vpack.c.b16 %v876, %v875
    %v891 = vpack.c.b16 %v878, %v877
    %v892 = vpack.c.b16 %v880, %v879
    %v893 = vpack.c.b16 %v882, %v881
    %v894 = vpack.c.b16 %v884, %v883
    %v895 = vpack.c.b16 %v886, %v885
    %v896 = vpack.c.b16 %v888, %v887
    %905 = vmatprep.subr.bf16.mxu0 0
    %906 = vmatpush1.bf16.msra.mxu0 %v896
    %907 = vmatprep.subr.bf16.mxu0 0
    %908 = vmatpush1.bf16.msra.mxu0 %v895
    %909 = vmatprep.subr.bf16.mxu0 0
    %910 = vmatpush1.bf16.msra.mxu0 %v894
    %911 = vmatprep.subr.bf16.mxu0 0
    %912 = vmatpush1.bf16.msra.mxu0 %v893
    %913 = vmatprep.subr.bf16.mxu0 0
    %914 = vmatpush1.bf16.msra.mxu0 %v892
    %915 = vmatprep.subr.bf16.mxu0 0
    %916 = vmatpush1.bf16.msra.mxu0 %v891
    %917 = vmatprep.subr.bf16.mxu0 0
    %918 = vmatpush1.bf16.msra.mxu0 %v890
    %919 = vmatprep.subr.bf16.mxu0 0
    %920 = vmatpush1.bf16.msra.mxu0 %v889
    %921 = vmatprep.subr.bf16.mxu0 0
    %922 = vmatpush2.bf16.msra.mxu0 0
    %923 = vmatprep.subr.bf16.mxu0 0
    %924 = vmatpush2.bf16.msra.mxu0 0
    %925 = vmatprep.subr.bf16.mxu0 0
    %926 = vmatpush2.bf16.msra.mxu0 0
    %927 = vmatprep.subr.bf16.mxu0 0
    %928 = vmatpush2.bf16.msra.mxu0 0
    %929 = vmatprep.subr.bf16.mxu0 0
    %930 = vmatpush2.bf16.msra.mxu0 0
    %931 = vmatprep.subr.bf16.mxu0 0
    %932 = vmatpush2.bf16.msra.mxu0 0
    %933 = vmatprep.subr.bf16.mxu0 0
    %934 = vmatpush2.bf16.msra.mxu0 0
    %935 = vmatprep.subr.bf16.mxu0 0
    %936 = vmatpush2.bf16.msra.mxu0 0
    %937 = vmatprep.mubr.bf16.mxu0 0
    %938 = vmatmul.mubr.bf16.gmra.mxu0 %v232
    %v939 = vpop.f32.mrf.mxu0
    %v940 = vadd.f32 %v856, %v939
    %v941 = vpop.f32.mrf.mxu0
    %v942 = vpop.f32.mrf.mxu0
    %v943 = vpop.f32.mrf.mxu0
    %944 = vdwg.mxu0
    %v945 = vmax.f32 %v940, 0.0
    %s946 = scalar_lea.vmem [#allocation4], 64
    %v947 = vld [vmem:[%s946] sm:$0xf]
    %v948 = vld [vmem:[%s946 + $0x4] sm:$0xf]
    %v949 = vld [vmem:[%s946 + $0x8] sm:$0xf]
    %v950 = vld [vmem:[%s946 + $0xc] sm:$0xf]
    %v951 = vld [vmem:[%s946 + $0x10] sm:$0xf]
    %v952 = vld [vmem:[%s946 + $0x14] sm:$0xf]
    %v953 = vld [vmem:[%s946 + $0x18] sm:$0xf]
    %v954 = vld [vmem:[%s946 + $0x1c] sm:$0xf]
    %v955 = vld [vmem:[%s946 + $0x20] sm:$0xf]
    %v956 = vld [vmem:[%s946 + $0x24] sm:$0xf]
    %v957 = vld [vmem:[%s946 + $0x28] sm:$0xf]
    %v958 = vld [vmem:[%s946 + $0x2c] sm:$0xf]
    %v959 = vld [vmem:[%s946 + $0x30] sm:$0xf]
    %v960 = vld [vmem:[%s946 + $0x34] sm:$0xf]
    %v961 = vld [vmem:[%s946 + $0x38] sm:$0xf]
    %v962 = vld [vmem:[%s946 + $0x3c] sm:$0xf]
    %v963 = vpack.c.bf16 %v945, %v945
    %v964 = vld [vmem:[#allocation9 + $0x2] ss:$0 sm:$0xff]
    %v981 = vunpack.c.l.b16 %v947
    %v982 = vunpack.c.l.b16 %v948
    %v983 = vunpack.c.l.b16 %v949
    %v984 = vunpack.c.l.b16 %v950
    %v985 = vunpack.c.l.b16 %v951
    %v986 = vunpack.c.l.b16 %v952
    %v987 = vunpack.c.l.b16 %v953
    %v988 = vunpack.c.l.b16 %v954
    %v989 = vunpack.c.l.b16 %v955
    %v990 = vunpack.c.l.b16 %v956
    %v991 = vunpack.c.l.b16 %v957
    %v992 = vunpack.c.l.b16 %v958
    %v993 = vunpack.c.l.b16 %v959
    %v994 = vunpack.c.l.b16 %v960
    %v995 = vunpack.c.l.b16 %v961
    %v996 = vunpack.c.l.b16 %v962
    %v997 = vpack.c.b16 %v982, %v981
    %v998 = vpack.c.b16 %v984, %v983
    %v999 = vpack.c.b16 %v986, %v985
    %v1000 = vpack.c.b16 %v988, %v987
    %v1001 = vpack.c.b16 %v990, %v989
    %v1002 = vpack.c.b16 %v992, %v991
    %v1003 = vpack.c.b16 %v994, %v993
    %v1004 = vpack.c.b16 %v996, %v995
    %1013 = vmatprep.subr.bf16.mxu0 0
    %1014 = vmatpush1.bf16.msra.mxu0 %v1004
    %1015 = vmatprep.subr.bf16.mxu0 0
    %1016 = vmatpush1.bf16.msra.mxu0 %v1003
    %1017 = vmatprep.subr.bf16.mxu0 0
    %1018 = vmatpush1.bf16.msra.mxu0 %v1002
    %1019 = vmatprep.subr.bf16.mxu0 0
    %1020 = vmatpush1.bf16.msra.mxu0 %v1001
    %1021 = vmatprep.subr.bf16.mxu0 0
    %1022 = vmatpush1.bf16.msra.mxu0 %v1000
    %1023 = vmatprep.subr.bf16.mxu0 0
    %1024 = vmatpush1.bf16.msra.mxu0 %v999
    %1025 = vmatprep.subr.bf16.mxu0 0
    %1026 = vmatpush1.bf16.msra.mxu0 %v998
    %1027 = vmatprep.subr.bf16.mxu0 0
    %1028 = vmatpush1.bf16.msra.mxu0 %v997
    %1029 = vmatprep.subr.bf16.mxu0 0
    %1030 = vmatpush2.bf16.msra.mxu0 0
    %1031 = vmatprep.subr.bf16.mxu0 0
    %1032 = vmatpush2.bf16.msra.mxu0 0
    %1033 = vmatprep.subr.bf16.mxu0 0
    %1034 = vmatpush2.bf16.msra.mxu0 0
    %1035 = vmatprep.subr.bf16.mxu0 0
    %1036 = vmatpush2.bf16.msra.mxu0 0
    %1037 = vmatprep.subr.bf16.mxu0 0
    %1038 = vmatpush2.bf16.msra.mxu0 0
    %1039 = vmatprep.subr.bf16.mxu0 0
    %1040 = vmatpush2.bf16.msra.mxu0 0
    %1041 = vmatprep.subr.bf16.mxu0 0
    %1042 = vmatpush2.bf16.msra.mxu0 0
    %1043 = vmatprep.subr.bf16.mxu0 0
    %1044 = vmatpush2.bf16.msra.mxu0 0
    %1045 = vmatprep.mubr.bf16.mxu0 0
    %1046 = vmatmul.mubr.bf16.gmra.mxu0 %v963
    %v1047 = vpop.f32.mrf.mxu0
    %v1048 = vadd.f32 %v964, %v1047
    %v1049 = vpop.f32.mrf.mxu0
    %v1050 = vpop.f32.mrf.mxu0
    %v1051 = vpop.f32.mrf.mxu0
    %1052 = vdwg.mxu0
    %v1053 = vmax.f32 %v1048, 0.0
    %s1054 = scalar_lea.vmem [#allocation6], 256
    %v1055 = vld [vmem:[%s1054] sm:$0xff]
    %v1056 = vld [vmem:[%s1054 + $0x8] sm:$0xff]
    %v1057 = vld [vmem:[%s1054 + $0x10] sm:$0xff]
    %v1058 = vld [vmem:[%s1054 + $0x18] sm:$0xff]
    %v1059 = vld [vmem:[%s1054 + $0x20] sm:$0xff]
    %v1060 = vld [vmem:[%s1054 + $0x28] sm:$0xff]
    %v1061 = vld [vmem:[%s1054 + $0x30] sm:$0xff]
    %v1062 = vld [vmem:[%s1054 + $0x38] sm:$0xff]
    %v1063 = vld [vmem:[%s1054 + $0x40] sm:$0xff]
    %v1064 = vld [vmem:[%s1054 + $0x48] sm:$0xff]
    %v1065 = vld [vmem:[%s1054 + $0x50] sm:$0xff]
    %v1066 = vld [vmem:[%s1054 + $0x58] sm:$0xff]
    %v1067 = vld [vmem:[%s1054 + $0x60] sm:$0xff]
    %v1068 = vld [vmem:[%s1054 + $0x68] sm:$0xff]
    %v1069 = vld [vmem:[%s1054 + $0x70] sm:$0xff]
    %v1070 = vld [vmem:[%s1054 + $0x78] sm:$0xff]
    %v1071 = vld [vmem:[%s1054 + $0x80] sm:$0xff]
    %v1072 = vld [vmem:[%s1054 + $0x88] sm:$0xff]
    %v1073 = vld [vmem:[%s1054 + $0x90] sm:$0xff]
    %v1074 = vld [vmem:[%s1054 + $0x98] sm:$0xff]
    %v1075 = vld [vmem:[%s1054 + $0xa0] sm:$0xff]
    %v1076 = vld [vmem:[%s1054 + $0xa8] sm:$0xff]
    %v1077 = vld [vmem:[%s1054 + $0xb0] sm:$0xff]
    %v1078 = vld [vmem:[%s1054 + $0xb8] sm:$0xff]
    %v1079 = vld [vmem:[%s1054 + $0xc0] sm:$0xff]
    %v1080 = vld [vmem:[%s1054 + $0xc8] sm:$0xff]
    %v1081 = vld [vmem:[%s1054 + $0xd0] sm:$0xff]
    %v1082 = vld [vmem:[%s1054 + $0xd8] sm:$0xff]
    %v1083 = vld [vmem:[%s1054 + $0xe0] sm:$0xff]
    %v1084 = vld [vmem:[%s1054 + $0xe8] sm:$0xff]
    %v1085 = vld [vmem:[%s1054 + $0xf0] sm:$0xff]
    %v1086 = vld [vmem:[%s1054 + $0xf8] sm:$0xff]
    %v1087 = vpack.c.bf16 %v1053, %v1053
    %s1088 = scalar_lea.vmem [#allocation9], 5
    %v1089 = vld [vmem:[%s1088] ss:$8 sm:$0xf]
    %v1091 = vlaneseq
    %v1092 = vshrl.u32 %v1091, 7
    %v1093 = vsub.s32 0, %v1092
    %v1094 = vrot.slane %v1089, %v1093
    %v1095 = vlaneseq
    %v1096 = vshrl.u32 %v1095, 7
    %v1097 = vsub.s32 1, %v1096
    %v1098 = vrot.slane %v1089, %v1097
    %v1099 = vlaneseq
    %v1100 = vshrl.u32 %v1099, 7
    %v1101 = vsub.s32 2, %v1100
    %v1102 = vrot.slane %v1089, %v1101
    %v1103 = vlaneseq
    %v1104 = vshrl.u32 %v1103, 7
    %v1105 = vsub.s32 3, %v1104
    %v1106 = vrot.slane %v1089, %v1105
    %v1143 = vunpack.c.l.b16 %v1055
    %v1144 = vunpack.c.h.b16 %v1055
    %v1145 = vunpack.c.l.b16 %v1056
    %v1146 = vunpack.c.h.b16 %v1056
    %v1147 = vunpack.c.l.b16 %v1057
    %v1148 = vunpack.c.h.b16 %v1057
    %v1149 = vunpack.c.l.b16 %v1058
    %v1150 = vunpack.c.h.b16 %v1058
    %v1151 = vunpack.c.l.b16 %v1059
    %v1152 = vunpack.c.h.b16 %v1059
    %v1153 = vunpack.c.l.b16 %v1060
    %v1154 = vunpack.c.h.b16 %v1060
    %v1155 = vunpack.c.l.b16 %v1061
    %v1156 = vunpack.c.h.b16 %v1061
    %v1157 = vunpack.c.l.b16 %v1062
    %v1158 = vunpack.c.h.b16 %v1062
    %v1159 = vunpack.c.l.b16 %v1063
    %v1160 = vunpack.c.h.b16 %v1063
    %v1161 = vunpack.c.l.b16 %v1064
    %v1162 = vunpack.c.h.b16 %v1064
    %v1163 = vunpack.c.l.b16 %v1065
    %v1164 = vunpack.c.h.b16 %v1065
    %v1165 = vunpack.c.l.b16 %v1066
    %v1166 = vunpack.c.h.b16 %v1066
    %v1167 = vunpack.c.l.b16 %v1067
    %v1168 = vunpack.c.h.b16 %v1067
    %v1169 = vunpack.c.l.b16 %v1068
    %v1170 = vunpack.c.h.b16 %v1068
    %v1171 = vunpack.c.l.b16 %v1069
    %v1172 = vunpack.c.h.b16 %v1069
    %v1173 = vunpack.c.l.b16 %v1070
    %v1174 = vunpack.c.h.b16 %v1070
    %v1175 = vunpack.c.l.b16 %v1071
    %v1176 = vunpack.c.h.b16 %v1071
    %v1177 = vunpack.c.l.b16 %v1072
    %v1178 = vunpack.c.h.b16 %v1072
    %v1179 = vunpack.c.l.b16 %v1073
    %v1180 = vunpack.c.h.b16 %v1073
    %v1181 = vunpack.c.l.b16 %v1074
    %v1182 = vunpack.c.h.b16 %v1074
    %v1183 = vunpack.c.l.b16 %v1075
    %v1184 = vunpack.c.h.b16 %v1075
    %v1185 = vunpack.c.l.b16 %v1076
    %v1186 = vunpack.c.h.b16 %v1076
    %v1187 = vunpack.c.l.b16 %v1077
    %v1188 = vunpack.c.h.b16 %v1077
    %v1189 = vunpack.c.l.b16 %v1078
    %v1190 = vunpack.c.h.b16 %v1078
    %v1191 = vunpack.c.l.b16 %v1079
    %v1192 = vunpack.c.h.b16 %v1079
    %v1193 = vunpack.c.l.b16 %v1080
    %v1194 = vunpack.c.h.b16 %v1080
    %v1195 = vunpack.c.l.b16 %v1081
    %v1196 = vunpack.c.h.b16 %v1081
    %v1197 = vunpack.c.l.b16 %v1082
    %v1198 = vunpack.c.h.b16 %v1082
    %v1199 = vunpack.c.l.b16 %v1083
    %v1200 = vunpack.c.h.b16 %v1083
    %v1201 = vunpack.c.l.b16 %v1084
    %v1202 = vunpack.c.h.b16 %v1084
    %v1203 = vunpack.c.l.b16 %v1085
    %v1204 = vunpack.c.h.b16 %v1085
    %v1205 = vunpack.c.l.b16 %v1086
    %v1206 = vunpack.c.h.b16 %v1086
    %v1207 = vpack.c.b16 %v1147, %v1143
    %v1208 = vpack.c.b16 %v1148, %v1144
    %v1209 = vpack.c.b16 %v1149, %v1145
    %v1210 = vpack.c.b16 %v1150, %v1146
    %v1211 = vpack.c.b16 %v1155, %v1151
    %v1212 = vpack.c.b16 %v1156, %v1152
    %v1213 = vpack.c.b16 %v1157, %v1153
    %v1214 = vpack.c.b16 %v1158, %v1154
    %v1215 = vpack.c.b16 %v1163, %v1159
    %v1216 = vpack.c.b16 %v1164, %v1160
    %v1217 = vpack.c.b16 %v1165, %v1161
    %v1218 = vpack.c.b16 %v1166, %v1162
    %v1219 = vpack.c.b16 %v1171, %v1167
    %v1220 = vpack.c.b16 %v1172, %v1168
    %v1221 = vpack.c.b16 %v1173, %v1169
    %v1222 = vpack.c.b16 %v1174, %v1170
    %v1223 = vpack.c.b16 %v1179, %v1175
    %v1224 = vpack.c.b16 %v1180, %v1176
    %v1225 = vpack.c.b16 %v1181, %v1177
    %v1226 = vpack.c.b16 %v1182, %v1178
    %v1227 = vpack.c.b16 %v1187, %v1183
    %v1228 = vpack.c.b16 %v1188, %v1184
    %v1229 = vpack.c.b16 %v1189, %v1185
    %v1230 = vpack.c.b16 %v1190, %v1186
    %v1231 = vpack.c.b16 %v1195, %v1191
    %v1232 = vpack.c.b16 %v1196, %v1192
    %v1233 = vpack.c.b16 %v1197, %v1193
    %v1234 = vpack.c.b16 %v1198, %v1194
    %v1235 = vpack.c.b16 %v1203, %v1199
    %v1236 = vpack.c.b16 %v1204, %v1200
    %v1237 = vpack.c.b16 %v1205, %v1201
    %v1238 = vpack.c.b16 %v1206, %v1202
    %1271 = vmatprep.subr.bf16.mxu0 %v1236
    %1272 = vmatpush1.bf16.msra.mxu0 %v1235
    %1273 = vmatprep.subr.bf16.mxu0 %v1232
    %1274 = vmatpush1.bf16.msra.mxu0 %v1231
    %1275 = vmatprep.subr.bf16.mxu0 %v1228
    %1276 = vmatpush1.bf16.msra.mxu0 %v1227
    %1277 = vmatprep.subr.bf16.mxu0 %v1224
    %1278 = vmatpush1.bf16.msra.mxu0 %v1223
    %1279 = vmatprep.subr.bf16.mxu0 %v1220
    %1280 = vmatpush1.bf16.msra.mxu0 %v1219
    %1281 = vmatprep.subr.bf16.mxu0 %v1216
    %1282 = vmatpush1.bf16.msra.mxu0 %v1215
    %1283 = vmatprep.subr.bf16.mxu0 %v1212
    %1284 = vmatpush1.bf16.msra.mxu0 %v1211
    %1285 = vmatprep.subr.bf16.mxu0 %v1208
    %1286 = vmatpush1.bf16.msra.mxu0 %v1207
    %1287 = vmatprep.subr.bf16.mxu0 0
    %1288 = vmatpush2.bf16.msra.mxu0 0
    %1289 = vmatprep.subr.bf16.mxu0 0
    %1290 = vmatpush2.bf16.msra.mxu0 0
    %1291 = vmatprep.subr.bf16.mxu0 0
    %1292 = vmatpush2.bf16.msra.mxu0 0
    %1293 = vmatprep.subr.bf16.mxu0 0
    %1294 = vmatpush2.bf16.msra.mxu0 0
    %1295 = vmatprep.subr.bf16.mxu0 0
    %1296 = vmatpush2.bf16.msra.mxu0 0
    %1297 = vmatprep.subr.bf16.mxu0 0
    %1298 = vmatpush2.bf16.msra.mxu0 0
    %1299 = vmatprep.subr.bf16.mxu0 0
    %1300 = vmatpush2.bf16.msra.mxu0 0
    %1301 = vmatprep.subr.bf16.mxu0 0
    %1302 = vmatpush2.bf16.msra.mxu0 0
    %1303 = vmatprep.mubr.bf16.mxu0 0
    %1304 = vmatmul.mubr.bf16.gmra.mxu0 %v1087
    %v1305 = vpop.f32.mrf.mxu0
    %v1306 = vadd.f32 %v1094, %v1305
    %v1307 = vpop.f32.mrf.mxu0
    %v1308 = vadd.f32 %v1098, %v1307
    %v1309 = vpop.f32.mrf.mxu0
    %v1310 = vpop.f32.mrf.mxu0
    %1311 = vdwg.mxu0
    %1312 = vmatprep.subr.bf16.mxu0 %v1238
    %1313 = vmatpush1.bf16.msra.mxu0 %v1237
    %1314 = vmatprep.subr.bf16.mxu0 %v1234
    %1315 = vmatpush1.bf16.msra.mxu0 %v1233
    %1316 = vmatprep.subr.bf16.mxu0 %v1230
    %1317 = vmatpush1.bf16.msra.mxu0 %v1229
    %1318 = vmatprep.subr.bf16.mxu0 %v1226
    %1319 = vmatpush1.bf16.msra.mxu0 %v1225
    %1320 = vmatprep.subr.bf16.mxu0 %v1222
    %1321 = vmatpush1.bf16.msra.mxu0 %v1221
    %1322 = vmatprep.subr.bf16.mxu0 %v1218
    %1323 = vmatpush1.bf16.msra.mxu0 %v1217
    %1324 = vmatprep.subr.bf16.mxu0 %v1214
    %1325 = vmatpush1.bf16.msra.mxu0 %v1213
    %1326 = vmatprep.subr.bf16.mxu0 %v1210
    %1327 = vmatpush1.bf16.msra.mxu0 %v1209
    %1328 = vmatprep.subr.bf16.mxu0 0
    %1329 = vmatpush2.bf16.msra.mxu0 0
    %1330 = vmatprep.subr.bf16.mxu0 0
    %1331 = vmatpush2.bf16.msra.mxu0 0
    %1332 = vmatprep.subr.bf16.mxu0 0
    %1333 = vmatpush2.bf16.msra.mxu0 0
    %1334 = vmatprep.subr.bf16.mxu0 0
    %1335 = vmatpush2.bf16.msra.mxu0 0
    %1336 = vmatprep.subr.bf16.mxu0 0
    %1337 = vmatpush2.bf16.msra.mxu0 0
    %1338 = vmatprep.subr.bf16.mxu0 0
    %1339 = vmatpush2.bf16.msra.mxu0 0
    %1340 = vmatprep.subr.bf16.mxu0 0
    %1341 = vmatpush2.bf16.msra.mxu0 0
    %1342 = vmatprep.subr.bf16.mxu0 0
    %1343 = vmatpush2.bf16.msra.mxu0 0
    %1344 = vmatprep.mubr.bf16.mxu0 0
    %1345 = vmatmul.mubr.bf16.gmra.mxu0 %v1087
    %v1346 = vpop.f32.mrf.mxu0
    %v1347 = vadd.f32 %v1102, %v1346
    %v1348 = vpop.f32.mrf.mxu0
    %v1349 = vadd.f32 %v1106, %v1348
    %v1350 = vpop.f32.mrf.mxu0
    %v1351 = vpop.f32.mrf.mxu0
    %1352 = vdwg.mxu0
    %s1353 = scalar_lea.vmem [#allocation7], 256
    %v1354 = vld [vmem:[%s1353] sm:$0xf]
    %v1355 = vld [vmem:[%s1353 + $0x4] sm:$0xf]
    %v1356 = vld [vmem:[%s1353 + $0x8] sm:$0xf]
    %v1357 = vld [vmem:[%s1353 + $0xc] sm:$0xf]
    %v1358 = vld [vmem:[%s1353 + $0x10] sm:$0xf]
    %v1359 = vld [vmem:[%s1353 + $0x14] sm:$0xf]
    %v1360 = vld [vmem:[%s1353 + $0x18] sm:$0xf]
    %v1361 = vld [vmem:[%s1353 + $0x1c] sm:$0xf]
    %v1362 = vld [vmem:[%s1353 + $0x20] sm:$0xf]
    %v1363 = vld [vmem:[%s1353 + $0x24] sm:$0xf]
    %v1364 = vld [vmem:[%s1353 + $0x28] sm:$0xf]
    %v1365 = vld [vmem:[%s1353 + $0x2c] sm:$0xf]
    %v1366 = vld [vmem:[%s1353 + $0x30] sm:$0xf]
    %v1367 = vld [vmem:[%s1353 + $0x34] sm:$0xf]
    %v1368 = vld [vmem:[%s1353 + $0x38] sm:$0xf]
    %v1369 = vld [vmem:[%s1353 + $0x3c] sm:$0xf]
    %v1370 = vld [vmem:[%s1353 + $0x40] sm:$0xf]
    %v1371 = vld [vmem:[%s1353 + $0x44] sm:$0xf]
    %v1372 = vld [vmem:[%s1353 + $0x48] sm:$0xf]
    %v1373 = vld [vmem:[%s1353 + $0x4c] sm:$0xf]
    %v1374 = vld [vmem:[%s1353 + $0x50] sm:$0xf]
    %v1375 = vld [vmem:[%s1353 + $0x54] sm:$0xf]
    %v1376 = vld [vmem:[%s1353 + $0x58] sm:$0xf]
    %v1377 = vld [vmem:[%s1353 + $0x5c] sm:$0xf]
    %v1378 = vld [vmem:[%s1353 + $0x60] sm:$0xf]
    %v1379 = vld [vmem:[%s1353 + $0x64] sm:$0xf]
    %v1380 = vld [vmem:[%s1353 + $0x68] sm:$0xf]
    %v1381 = vld [vmem:[%s1353 + $0x6c] sm:$0xf]
    %v1382 = vld [vmem:[%s1353 + $0x70] sm:$0xf]
    %v1383 = vld [vmem:[%s1353 + $0x74] sm:$0xf]
    %v1384 = vld [vmem:[%s1353 + $0x78] sm:$0xf]
    %v1385 = vld [vmem:[%s1353 + $0x7c] sm:$0xf]
    %v1386 = vld [vmem:[%s1353 + $0x80] sm:$0xf]
    %v1387 = vld [vmem:[%s1353 + $0x84] sm:$0xf]
    %v1388 = vld [vmem:[%s1353 + $0x88] sm:$0xf]
    %v1389 = vld [vmem:[%s1353 + $0x8c] sm:$0xf]
    %v1390 = vld [vmem:[%s1353 + $0x90] sm:$0xf]
    %v1391 = vld [vmem:[%s1353 + $0x94] sm:$0xf]
    %v1392 = vld [vmem:[%s1353 + $0x98] sm:$0xf]
    %v1393 = vld [vmem:[%s1353 + $0x9c] sm:$0xf]
    %v1394 = vld [vmem:[%s1353 + $0xa0] sm:$0xf]
    %v1395 = vld [vmem:[%s1353 + $0xa4] sm:$0xf]
    %v1396 = vld [vmem:[%s1353 + $0xa8] sm:$0xf]
    %v1397 = vld [vmem:[%s1353 + $0xac] sm:$0xf]
    %v1398 = vld [vmem:[%s1353 + $0xb0] sm:$0xf]
    %v1399 = vld [vmem:[%s1353 + $0xb4] sm:$0xf]
    %v1400 = vld [vmem:[%s1353 + $0xb8] sm:$0xf]
    %v1401 = vld [vmem:[%s1353 + $0xbc] sm:$0xf]
    %v1402 = vld [vmem:[%s1353 + $0xc0] sm:$0xf]
    %v1403 = vld [vmem:[%s1353 + $0xc4] sm:$0xf]
    %v1404 = vld [vmem:[%s1353 + $0xc8] sm:$0xf]
    %v1405 = vld [vmem:[%s1353 + $0xcc] sm:$0xf]
    %v1406 = vld [vmem:[%s1353 + $0xd0] sm:$0xf]
    %v1407 = vld [vmem:[%s1353 + $0xd4] sm:$0xf]
    %v1408 = vld [vmem:[%s1353 + $0xd8] sm:$0xf]
    %v1409 = vld [vmem:[%s1353 + $0xdc] sm:$0xf]
    %v1410 = vld [vmem:[%s1353 + $0xe0] sm:$0xf]
    %v1411 = vld [vmem:[%s1353 + $0xe4] sm:$0xf]
    %v1412 = vld [vmem:[%s1353 + $0xe8] sm:$0xf]
    %v1413 = vld [vmem:[%s1353 + $0xec] sm:$0xf]
    %v1414 = vld [vmem:[%s1353 + $0xf0] sm:$0xf]
    %v1415 = vld [vmem:[%s1353 + $0xf4] sm:$0xf]
    %v1416 = vld [vmem:[%s1353 + $0xf8] sm:$0xf]
    %v1417 = vld [vmem:[%s1353 + $0xfc] sm:$0xf]
    %v1418 = vpack.c.bf16 %v1306, %v1306
    %v1419 = vpack.c.bf16 %v1308, %v1308
    %v1420 = vpack.c.bf16 %v1347, %v1347
    %v1421 = vpack.c.bf16 %v1349, %v1349
    %v1422 = vld [vmem:[#allocation9 + $0x6] ss:$0 sm:$0xff]
    %v1487 = vunpack.c.l.b16 %v1354
    %v1488 = vunpack.c.l.b16 %v1355
    %v1489 = vunpack.c.l.b16 %v1356
    %v1490 = vunpack.c.l.b16 %v1357
    %v1491 = vunpack.c.l.b16 %v1358
    %v1492 = vunpack.c.l.b16 %v1359
    %v1493 = vunpack.c.l.b16 %v1360
    %v1494 = vunpack.c.l.b16 %v1361
    %v1495 = vunpack.c.l.b16 %v1362
    %v1496 = vunpack.c.l.b16 %v1363
    %v1497 = vunpack.c.l.b16 %v1364
    %v1498 = vunpack.c.l.b16 %v1365
    %v1499 = vunpack.c.l.b16 %v1366
    %v1500 = vunpack.c.l.b16 %v1367
    %v1501 = vunpack.c.l.b16 %v1368
    %v1502 = vunpack.c.l.b16 %v1369
    %v1503 = vunpack.c.l.b16 %v1370
    %v1504 = vunpack.c.l.b16 %v1371
    %v1505 = vunpack.c.l.b16 %v1372
    %v1506 = vunpack.c.l.b16 %v1373
    %v1507 = vunpack.c.l.b16 %v1374
    %v1508 = vunpack.c.l.b16 %v1375
    %v1509 = vunpack.c.l.b16 %v1376
    %v1510 = vunpack.c.l.b16 %v1377
    %v1511 = vunpack.c.l.b16 %v1378
    %v1512 = vunpack.c.l.b16 %v1379
    %v1513 = vunpack.c.l.b16 %v1380
    %v1514 = vunpack.c.l.b16 %v1381
    %v1515 = vunpack.c.l.b16 %v1382
    %v1516 = vunpack.c.l.b16 %v1383
    %v1517 = vunpack.c.l.b16 %v1384
    %v1518 = vunpack.c.l.b16 %v1385
    %v1519 = vunpack.c.l.b16 %v1386
    %v1520 = vunpack.c.l.b16 %v1387
    %v1521 = vunpack.c.l.b16 %v1388
    %v1522 = vunpack.c.l.b16 %v1389
    %v1523 = vunpack.c.l.b16 %v1390
    %v1524 = vunpack.c.l.b16 %v1391
    %v1525 = vunpack.c.l.b16 %v1392
    %v1526 = vunpack.c.l.b16 %v1393
    %v1527 = vunpack.c.l.b16 %v1394
    %v1528 = vunpack.c.l.b16 %v1395
    %v1529 = vunpack.c.l.b16 %v1396
    %v1530 = vunpack.c.l.b16 %v1397
    %v1531 = vunpack.c.l.b16 %v1398
    %v1532 = vunpack.c.l.b16 %v1399
    %v1533 = vunpack.c.l.b16 %v1400
    %v1534 = vunpack.c.l.b16 %v1401
    %v1535 = vunpack.c.l.b16 %v1402
    %v1536 = vunpack.c.l.b16 %v1403
    %v1537 = vunpack.c.l.b16 %v1404
    %v1538 = vunpack.c.l.b16 %v1405
    %v1539 = vunpack.c.l.b16 %v1406
    %v1540 = vunpack.c.l.b16 %v1407
    %v1541 = vunpack.c.l.b16 %v1408
    %v1542 = vunpack.c.l.b16 %v1409
    %v1543 = vunpack.c.l.b16 %v1410
    %v1544 = vunpack.c.l.b16 %v1411
    %v1545 = vunpack.c.l.b16 %v1412
    %v1546 = vunpack.c.l.b16 %v1413
    %v1547 = vunpack.c.l.b16 %v1414
    %v1548 = vunpack.c.l.b16 %v1415
    %v1549 = vunpack.c.l.b16 %v1416
    %v1550 = vunpack.c.l.b16 %v1417
    %v1551 = vpack.c.b16 %v1488, %v1487
    %v1552 = vpack.c.b16 %v1490, %v1489
    %v1553 = vpack.c.b16 %v1492, %v1491
    %v1554 = vpack.c.b16 %v1494, %v1493
    %v1555 = vpack.c.b16 %v1496, %v1495
    %v1556 = vpack.c.b16 %v1498, %v1497
    %v1557 = vpack.c.b16 %v1500, %v1499
    %v1558 = vpack.c.b16 %v1502, %v1501
    %v1559 = vpack.c.b16 %v1504, %v1503
    %v1560 = vpack.c.b16 %v1506, %v1505
    %v1561 = vpack.c.b16 %v1508, %v1507
    %v1562 = vpack.c.b16 %v1510, %v1509
    %v1563 = vpack.c.b16 %v1512, %v1511
    %v1564 = vpack.c.b16 %v1514, %v1513
    %v1565 = vpack.c.b16 %v1516, %v1515
    %v1566 = vpack.c.b16 %v1518, %v1517
    %v1567 = vpack.c.b16 %v1520, %v1519
    %v1568 = vpack.c.b16 %v1522, %v1521
    %v1569 = vpack.c.b16 %v1524, %v1523
    %v1570 = vpack.c.b16 %v1526, %v1525
    %v1571 = vpack.c.b16 %v1528, %v1527
    %v1572 = vpack.c.b16 %v1530, %v1529
    %v1573 = vpack.c.b16 %v1532, %v1531
    %v1574 = vpack.c.b16 %v1534, %v1533
    %v1575 = vpack.c.b16 %v1536, %v1535
    %v1576 = vpack.c.b16 %v1538, %v1537
    %v1577 = vpack.c.b16 %v1540, %v1539
    %v1578 = vpack.c.b16 %v1542, %v1541
    %v1579 = vpack.c.b16 %v1544, %v1543
    %v1580 = vpack.c.b16 %v1546, %v1545
    %v1581 = vpack.c.b16 %v1548, %v1547
    %v1582 = vpack.c.b16 %v1550, %v1549
    %1615 = vmatprep.subr.bf16.mxu0 0
    %1616 = vmatpush1.bf16.msra.mxu0 %v1558
    %1617 = vmatprep.subr.bf16.mxu0 0
    %1618 = vmatpush1.bf16.msra.mxu0 %v1557
    %1619 = vmatprep.subr.bf16.mxu0 0
    %1620 = vmatpush1.bf16.msra.mxu0 %v1556
    %1621 = vmatprep.subr.bf16.mxu0 0
    %1622 = vmatpush1.bf16.msra.mxu0 %v1555
    %1623 = vmatprep.subr.bf16.mxu0 0
    %1624 = vmatpush1.bf16.msra.mxu0 %v1554
    %1625 = vmatprep.subr.bf16.mxu0 0
    %1626 = vmatpush1.bf16.msra.mxu0 %v1553
    %1627 = vmatprep.subr.bf16.mxu0 0
    %1628 = vmatpush1.bf16.msra.mxu0 %v1552
    %1629 = vmatprep.subr.bf16.mxu0 0
    %1630 = vmatpush1.bf16.msra.mxu0 %v1551
    %1631 = vmatprep.subr.bf16.mxu0 0
    %1632 = vmatpush2.bf16.msra.mxu0 %v1566
    %1633 = vmatprep.subr.bf16.mxu0 0
    %1634 = vmatpush2.bf16.msra.mxu0 %v1565
    %1635 = vmatprep.subr.bf16.mxu0 0
    %1636 = vmatpush2.bf16.msra.mxu0 %v1564
    %1637 = vmatprep.subr.bf16.mxu0 0
    %1638 = vmatpush2.bf16.msra.mxu0 %v1563
    %1639 = vmatprep.subr.bf16.mxu0 0
    %1640 = vmatpush2.bf16.msra.mxu0 %v1562
    %1641 = vmatprep.subr.bf16.mxu0 0
    %1642 = vmatpush2.bf16.msra.mxu0 %v1561
    %1643 = vmatprep.subr.bf16.mxu0 0
    %1644 = vmatpush2.bf16.msra.mxu0 %v1560
    %1645 = vmatprep.subr.bf16.mxu0 0
    %1646 = vmatpush2.bf16.msra.mxu0 %v1559
    %1647 = vmatprep.mubr.bf16.mxu0 %v1419
    %1648 = vmatmul.mubr.bf16.gmra.mxu0 %v1418
    %v1649 = vpop.f32.mrf.mxu0
    %v1650 = vadd.f32 %v1422, %v1649
    %v1651 = vpop.f32.mrf.mxu0
    %v1652 = vpop.f32.mrf.mxu0
    %v1653 = vpop.f32.mrf.mxu0
    %1654 = vdwg.mxu0
    %1655 = vmatprep.subr.bf16.mxu0 0
    %1656 = vmatpush1.bf16.msra.mxu0 %v1574
    %1657 = vmatprep.subr.bf16.mxu0 0
    %1658 = vmatpush1.bf16.msra.mxu0 %v1573
    %1659 = vmatprep.subr.bf16.mxu0 0
    %1660 = vmatpush1.bf16.msra.mxu0 %v1572
    %1661 = vmatprep.subr.bf16.mxu0 0
    %1662 = vmatpush1.bf16.msra.mxu0 %v1571
    %1663 = vmatprep.subr.bf16.mxu0 0
    %1664 = vmatpush1.bf16.msra.mxu0 %v1570
    %1665 = vmatprep.subr.bf16.mxu0 0
    %1666 = vmatpush1.bf16.msra.mxu0 %v1569
    %1667 = vmatprep.subr.bf16.mxu0 0
    %1668 = vmatpush1.bf16.msra.mxu0 %v1568
    %1669 = vmatprep.subr.bf16.mxu0 0
    %1670 = vmatpush1.bf16.msra.mxu0 %v1567
    %1671 = vmatprep.subr.bf16.mxu0 0
    %1672 = vmatpush2.bf16.msra.mxu0 %v1582
    %1673 = vmatprep.subr.bf16.mxu0 0
    %1674 = vmatpush2.bf16.msra.mxu0 %v1581
    %1675 = vmatprep.subr.bf16.mxu0 0
    %1676 = vmatpush2.bf16.msra.mxu0 %v1580
    %1677 = vmatprep.subr.bf16.mxu0 0
    %1678 = vmatpush2.bf16.msra.mxu0 %v1579
    %1679 = vmatprep.subr.bf16.mxu0 0
    %1680 = vmatpush2.bf16.msra.mxu0 %v1578
    %1681 = vmatprep.subr.bf16.mxu0 0
    %1682 = vmatpush2.bf16.msra.mxu0 %v1577
    %1683 = vmatprep.subr.bf16.mxu0 0
    %1684 = vmatpush2.bf16.msra.mxu0 %v1576
    %1685 = vmatprep.subr.bf16.mxu0 0
    %1686 = vmatpush2.bf16.msra.mxu0 %v1575
    %1687 = vmatprep.mubr.bf16.mxu0 %v1421
    %1688 = vmatmul.mubr.bf16.gmra.mxu0 %v1420
    %v1689 = vpop.f32.mrf.mxu0
    %v1690 = vadd.f32 %v1650, %v1689
    %v1691 = vpop.f32.mrf.mxu0
    %v1692 = vpop.f32.mrf.mxu0
    %v1693 = vpop.f32.mrf.mxu0
    %1694 = vdwg.mxu0
    %s1695 = scalar_lea.vmem %s6, 8
    %1696 = vst [vmem:[%s1695] sm:$0xff] %v1690
    %s1697 = scalar_lea.vmem [#allocation4], 128
    %v1698 = vld [vmem:[%s1697] sm:$0xf]
    %v1699 = vld [vmem:[%s1697 + $0x4] sm:$0xf]
    %v1700 = vld [vmem:[%s1697 + $0x8] sm:$0xf]
    %v1701 = vld [vmem:[%s1697 + $0xc] sm:$0xf]
    %v1702 = vld [vmem:[%s1697 + $0x10] sm:$0xf]
    %v1703 = vld [vmem:[%s1697 + $0x14] sm:$0xf]
    %v1704 = vld [vmem:[%s1697 + $0x18] sm:$0xf]
    %v1705 = vld [vmem:[%s1697 + $0x1c] sm:$0xf]
    %v1706 = vld [vmem:[%s1697 + $0x20] sm:$0xf]
    %v1707 = vld [vmem:[%s1697 + $0x24] sm:$0xf]
    %v1708 = vld [vmem:[%s1697 + $0x28] sm:$0xf]
    %v1709 = vld [vmem:[%s1697 + $0x2c] sm:$0xf]
    %v1710 = vld [vmem:[%s1697 + $0x30] sm:$0xf]
    %v1711 = vld [vmem:[%s1697 + $0x34] sm:$0xf]
    %v1712 = vld [vmem:[%s1697 + $0x38] sm:$0xf]
    %v1713 = vld [vmem:[%s1697 + $0x3c] sm:$0xf]
    %v1714 = vld [vmem:[#allocation9 + $0x7] ss:$0 sm:$0xff]
    %v1731 = vunpack.c.l.b16 %v1698
    %v1732 = vunpack.c.l.b16 %v1699
    %v1733 = vunpack.c.l.b16 %v1700
    %v1734 = vunpack.c.l.b16 %v1701
    %v1735 = vunpack.c.l.b16 %v1702
    %v1736 = vunpack.c.l.b16 %v1703
    %v1737 = vunpack.c.l.b16 %v1704
    %v1738 = vunpack.c.l.b16 %v1705
    %v1739 = vunpack.c.l.b16 %v1706
    %v1740 = vunpack.c.l.b16 %v1707
    %v1741 = vunpack.c.l.b16 %v1708
    %v1742 = vunpack.c.l.b16 %v1709
    %v1743 = vunpack.c.l.b16 %v1710
    %v1744 = vunpack.c.l.b16 %v1711
    %v1745 = vunpack.c.l.b16 %v1712
    %v1746 = vunpack.c.l.b16 %v1713
    %v1747 = vpack.c.b16 %v1732, %v1731
    %v1748 = vpack.c.b16 %v1734, %v1733
    %v1749 = vpack.c.b16 %v1736, %v1735
    %v1750 = vpack.c.b16 %v1738, %v1737
    %v1751 = vpack.c.b16 %v1740, %v1739
    %v1752 = vpack.c.b16 %v1742, %v1741
    %v1753 = vpack.c.b16 %v1744, %v1743
    %v1754 = vpack.c.b16 %v1746, %v1745
    %1763 = vmatprep.subr.bf16.mxu0 0
    %1764 = vmatpush1.bf16.msra.mxu0 %v1754
    %1765 = vmatprep.subr.bf16.mxu0 0
    %1766 = vmatpush1.bf16.msra.mxu0 %v1753
    %1767 = vmatprep.subr.bf16.mxu0 0
    %1768 = vmatpush1.bf16.msra.mxu0 %v1752
    %1769 = vmatprep.subr.bf16.mxu0 0
    %1770 = vmatpush1.bf16.msra.mxu0 %v1751
    %1771 = vmatprep.subr.bf16.mxu0 0
    %1772 = vmatpush1.bf16.msra.mxu0 %v1750
    %1773 = vmatprep.subr.bf16.mxu0 0
    %1774 = vmatpush1.bf16.msra.mxu0 %v1749
    %1775 = vmatprep.subr.bf16.mxu0 0
    %1776 = vmatpush1.bf16.msra.mxu0 %v1748
    %1777 = vmatprep.subr.bf16.mxu0 0
    %1778 = vmatpush1.bf16.msra.mxu0 %v1747
    %1779 = vmatprep.subr.bf16.mxu0 0
    %1780 = vmatpush2.bf16.msra.mxu0 0
    %1781 = vmatprep.subr.bf16.mxu0 0
    %1782 = vmatpush2.bf16.msra.mxu0 0
    %1783 = vmatprep.subr.bf16.mxu0 0
    %1784 = vmatpush2.bf16.msra.mxu0 0
    %1785 = vmatprep.subr.bf16.mxu0 0
    %1786 = vmatpush2.bf16.msra.mxu0 0
    %1787 = vmatprep.subr.bf16.mxu0 0
    %1788 = vmatpush2.bf16.msra.mxu0 0
    %1789 = vmatprep.subr.bf16.mxu0 0
    %1790 = vmatpush2.bf16.msra.mxu0 0
    %1791 = vmatprep.subr.bf16.mxu0 0
    %1792 = vmatpush2.bf16.msra.mxu0 0
    %1793 = vmatprep.subr.bf16.mxu0 0
    %1794 = vmatpush2.bf16.msra.mxu0 0
    %1795 = vmatprep.mubr.bf16.mxu0 0
    %1796 = vmatmul.mubr.bf16.gmra.mxu0 %v1087
    %v1797 = vpop.f32.mrf.mxu0
    %v1798 = vadd.f32 %v1714, %v1797
    %v1799 = vpop.f32.mrf.mxu0
    %v1800 = vpop.f32.mrf.mxu0
    %v1801 = vpop.f32.mrf.mxu0
    %1802 = vdwg.mxu0
    %s1803 = scalar_lea.vmem [#allocation6], 512
    %v1804 = vld [vmem:[%s1803] sm:$0xff]
    %v1805 = vld [vmem:[%s1803 + $0x8] sm:$0xff]
    %v1806 = vld [vmem:[%s1803 + $0x10] sm:$0xff]
    %v1807 = vld [vmem:[%s1803 + $0x18] sm:$0xff]
    %v1808 = vld [vmem:[%s1803 + $0x20] sm:$0xff]
    %v1809 = vld [vmem:[%s1803 + $0x28] sm:$0xff]
    %v1810 = vld [vmem:[%s1803 + $0x30] sm:$0xff]
    %v1811 = vld [vmem:[%s1803 + $0x38] sm:$0xff]
    %v1812 = vld [vmem:[%s1803 + $0x40] sm:$0xff]
    %v1813 = vld [vmem:[%s1803 + $0x48] sm:$0xff]
    %v1814 = vld [vmem:[%s1803 + $0x50] sm:$0xff]
    %v1815 = vld [vmem:[%s1803 + $0x58] sm:$0xff]
    %v1816 = vld [vmem:[%s1803 + $0x60] sm:$0xff]
    %v1817 = vld [vmem:[%s1803 + $0x68] sm:$0xff]
    %v1818 = vld [vmem:[%s1803 + $0x70] sm:$0xff]
    %v1819 = vld [vmem:[%s1803 + $0x78] sm:$0xff]
    %v1820 = vld [vmem:[%s1803 + $0x80] sm:$0xff]
    %v1821 = vld [vmem:[%s1803 + $0x88] sm:$0xff]
    %v1822 = vld [vmem:[%s1803 + $0x90] sm:$0xff]
    %v1823 = vld [vmem:[%s1803 + $0x98] sm:$0xff]
    %v1824 = vld [vmem:[%s1803 + $0xa0] sm:$0xff]
    %v1825 = vld [vmem:[%s1803 + $0xa8] sm:$0xff]
    %v1826 = vld [vmem:[%s1803 + $0xb0] sm:$0xff]
    %v1827 = vld [vmem:[%s1803 + $0xb8] sm:$0xff]
    %v1828 = vld [vmem:[%s1803 + $0xc0] sm:$0xff]
    %v1829 = vld [vmem:[%s1803 + $0xc8] sm:$0xff]
    %v1830 = vld [vmem:[%s1803 + $0xd0] sm:$0xff]
    %v1831 = vld [vmem:[%s1803 + $0xd8] sm:$0xff]
    %v1832 = vld [vmem:[%s1803 + $0xe0] sm:$0xff]
    %v1833 = vld [vmem:[%s1803 + $0xe8] sm:$0xff]
    %v1834 = vld [vmem:[%s1803 + $0xf0] sm:$0xff]
    %v1835 = vld [vmem:[%s1803 + $0xf8] sm:$0xff]
    %v1836 = vpack.c.bf16 %v1798, %v1798
    %s1837 = scalar_lea.vmem [#allocation9], 32
    %v1838 = vld [vmem:[%s1837] ss:$8 sm:$0xf]
    %v1840 = vlaneseq
    %v1841 = vshrl.u32 %v1840, 7
    %v1842 = vsub.s32 0, %v1841
    %v1843 = vrot.slane %v1838, %v1842
    %v1844 = vlaneseq
    %v1845 = vshrl.u32 %v1844, 7
    %v1846 = vsub.s32 1, %v1845
    %v1847 = vrot.slane %v1838, %v1846
    %v1848 = vlaneseq
    %v1849 = vshrl.u32 %v1848, 7
    %v1850 = vsub.s32 2, %v1849
    %v1851 = vrot.slane %v1838, %v1850
    %v1852 = vlaneseq
    %v1853 = vshrl.u32 %v1852, 7
    %v1854 = vsub.s32 3, %v1853
    %v1855 = vrot.slane %v1838, %v1854
    %v1892 = vunpack.c.l.b16 %v1804
    %v1893 = vunpack.c.h.b16 %v1804
    %v1894 = vunpack.c.l.b16 %v1805
    %v1895 = vunpack.c.h.b16 %v1805
    %v1896 = vunpack.c.l.b16 %v1806
    %v1897 = vunpack.c.h.b16 %v1806
    %v1898 = vunpack.c.l.b16 %v1807
    %v1899 = vunpack.c.h.b16 %v1807
    %v1900 = vunpack.c.l.b16 %v1808
    %v1901 = vunpack.c.h.b16 %v1808
    %v1902 = vunpack.c.l.b16 %v1809
    %v1903 = vunpack.c.h.b16 %v1809
    %v1904 = vunpack.c.l.b16 %v1810
    %v1905 = vunpack.c.h.b16 %v1810
    %v1906 = vunpack.c.l.b16 %v1811
    %v1907 = vunpack.c.h.b16 %v1811
    %v1908 = vunpack.c.l.b16 %v1812
    %v1909 = vunpack.c.h.b16 %v1812
    %v1910 = vunpack.c.l.b16 %v1813
    %v1911 = vunpack.c.h.b16 %v1813
    %v1912 = vunpack.c.l.b16 %v1814
    %v1913 = vunpack.c.h.b16 %v1814
    %v1914 = vunpack.c.l.b16 %v1815
    %v1915 = vunpack.c.h.b16 %v1815
    %v1916 = vunpack.c.l.b16 %v1816
    %v1917 = vunpack.c.h.b16 %v1816
    %v1918 = vunpack.c.l.b16 %v1817
    %v1919 = vunpack.c.h.b16 %v1817
    %v1920 = vunpack.c.l.b16 %v1818
    %v1921 = vunpack.c.h.b16 %v1818
    %v1922 = vunpack.c.l.b16 %v1819
    %v1923 = vunpack.c.h.b16 %v1819
    %v1924 = vunpack.c.l.b16 %v1820
    %v1925 = vunpack.c.h.b16 %v1820
    %v1926 = vunpack.c.l.b16 %v1821
    %v1927 = vunpack.c.h.b16 %v1821
    %v1928 = vunpack.c.l.b16 %v1822
    %v1929 = vunpack.c.h.b16 %v1822
    %v1930 = vunpack.c.l.b16 %v1823
    %v1931 = vunpack.c.h.b16 %v1823
    %v1932 = vunpack.c.l.b16 %v1824
    %v1933 = vunpack.c.h.b16 %v1824
    %v1934 = vunpack.c.l.b16 %v1825
    %v1935 = vunpack.c.h.b16 %v1825
    %v1936 = vunpack.c.l.b16 %v1826
    %v1937 = vunpack.c.h.b16 %v1826
    %v1938 = vunpack.c.l.b16 %v1827
    %v1939 = vunpack.c.h.b16 %v1827
    %v1940 = vunpack.c.l.b16 %v1828
    %v1941 = vunpack.c.h.b16 %v1828
    %v1942 = vunpack.c.l.b16 %v1829
    %v1943 = vunpack.c.h.b16 %v1829
    %v1944 = vunpack.c.l.b16 %v1830
    %v1945 = vunpack.c.h.b16 %v1830
    %v1946 = vunpack.c.l.b16 %v1831
    %v1947 = vunpack.c.h.b16 %v1831
    %v1948 = vunpack.c.l.b16 %v1832
    %v1949 = vunpack.c.h.b16 %v1832
    %v1950 = vunpack.c.l.b16 %v1833
    %v1951 = vunpack.c.h.b16 %v1833
    %v1952 = vunpack.c.l.b16 %v1834
    %v1953 = vunpack.c.h.b16 %v1834
    %v1954 = vunpack.c.l.b16 %v1835
    %v1955 = vunpack.c.h.b16 %v1835
    %v1956 = vpack.c.b16 %v1896, %v1892
    %v1957 = vpack.c.b16 %v1897, %v1893
    %v1958 = vpack.c.b16 %v1898, %v1894
    %v1959 = vpack.c.b16 %v1899, %v1895
    %v1960 = vpack.c.b16 %v1904, %v1900
    %v1961 = vpack.c.b16 %v1905, %v1901
    %v1962 = vpack.c.b16 %v1906, %v1902
    %v1963 = vpack.c.b16 %v1907, %v1903
    %v1964 = vpack.c.b16 %v1912, %v1908
    %v1965 = vpack.c.b16 %v1913, %v1909
    %v1966 = vpack.c.b16 %v1914, %v1910
    %v1967 = vpack.c.b16 %v1915, %v1911
    %v1968 = vpack.c.b16 %v1920, %v1916
    %v1969 = vpack.c.b16 %v1921, %v1917
    %v1970 = vpack.c.b16 %v1922, %v1918
    %v1971 = vpack.c.b16 %v1923, %v1919
    %v1972 = vpack.c.b16 %v1928, %v1924
    %v1973 = vpack.c.b16 %v1929, %v1925
    %v1974 = vpack.c.b16 %v1930, %v1926
    %v1975 = vpack.c.b16 %v1931, %v1927
    %v1976 = vpack.c.b16 %v1936, %v1932
    %v1977 = vpack.c.b16 %v1937, %v1933
    %v1978 = vpack.c.b16 %v1938, %v1934
    %v1979 = vpack.c.b16 %v1939, %v1935
    %v1980 = vpack.c.b16 %v1944, %v1940
    %v1981 = vpack.c.b16 %v1945, %v1941
    %v1982 = vpack.c.b16 %v1946, %v1942
    %v1983 = vpack.c.b16 %v1947, %v1943
    %v1984 = vpack.c.b16 %v1952, %v1948
    %v1985 = vpack.c.b16 %v1953, %v1949
    %v1986 = vpack.c.b16 %v1954, %v1950
    %v1987 = vpack.c.b16 %v1955, %v1951
    %2020 = vmatprep.subr.bf16.mxu0 %v1985
    %2021 = vmatpush1.bf16.msra.mxu0 %v1984
    %2022 = vmatprep.subr.bf16.mxu0 %v1981
    %2023 = vmatpush1.bf16.msra.mxu0 %v1980
    %2024 = vmatprep.subr.bf16.mxu0 %v1977
    %2025 = vmatpush1.bf16.msra.mxu0 %v1976
    %2026 = vmatprep.subr.bf16.mxu0 %v1973
    %2027 = vmatpush1.bf16.msra.mxu0 %v1972
    %2028 = vmatprep.subr.bf16.mxu0 %v1969
    %2029 = vmatpush1.bf16.msra.mxu0 %v1968
    %2030 = vmatprep.subr.bf16.mxu0 %v1965
    %2031 = vmatpush1.bf16.msra.mxu0 %v1964
    %2032 = vmatprep.subr.bf16.mxu0 %v1961
    %2033 = vmatpush1.bf16.msra.mxu0 %v1960
    %2034 = vmatprep.subr.bf16.mxu0 %v1957
    %2035 = vmatpush1.bf16.msra.mxu0 %v1956
    %2036 = vmatprep.subr.bf16.mxu0 0
    %2037 = vmatpush2.bf16.msra.mxu0 0
    %2038 = vmatprep.subr.bf16.mxu0 0
    %2039 = vmatpush2.bf16.msra.mxu0 0
    %2040 = vmatprep.subr.bf16.mxu0 0
    %2041 = vmatpush2.bf16.msra.mxu0 0
    %2042 = vmatprep.subr.bf16.mxu0 0
    %2043 = vmatpush2.bf16.msra.mxu0 0
    %2044 = vmatprep.subr.bf16.mxu0 0
    %2045 = vmatpush2.bf16.msra.mxu0 0
    %2046 = vmatprep.subr.bf16.mxu0 0
    %2047 = vmatpush2.bf16.msra.mxu0 0
    %2048 = vmatprep.subr.bf16.mxu0 0
    %2049 = vmatpush2.bf16.msra.mxu0 0
    %2050 = vmatprep.subr.bf16.mxu0 0
    %2051 = vmatpush2.bf16.msra.mxu0 0
    %2052 = vmatprep.mubr.bf16.mxu0 0
    %2053 = vmatmul.mubr.bf16.gmra.mxu0 %v1836
    %v2054 = vpop.f32.mrf.mxu0
    %v2055 = vadd.f32 %v1843, %v2054
    %v2056 = vpop.f32.mrf.mxu0
    %v2057 = vadd.f32 %v1847, %v2056
    %v2058 = vpop.f32.mrf.mxu0
    %v2059 = vpop.f32.mrf.mxu0
    %2060 = vdwg.mxu0
    %2061 = vmatprep.subr.bf16.mxu0 %v1987
    %2062 = vmatpush1.bf16.msra.mxu0 %v1986
    %2063 = vmatprep.subr.bf16.mxu0 %v1983
    %2064 = vmatpush1.bf16.msra.mxu0 %v1982
    %2065 = vmatprep.subr.bf16.mxu0 %v1979
    %2066 = vmatpush1.bf16.msra.mxu0 %v1978
    %2067 = vmatprep.subr.bf16.mxu0 %v1975
    %2068 = vmatpush1.bf16.msra.mxu0 %v1974
    %2069 = vmatprep.subr.bf16.mxu0 %v1971
    %2070 = vmatpush1.bf16.msra.mxu0 %v1970
    %2071 = vmatprep.subr.bf16.mxu0 %v1967
    %2072 = vmatpush1.bf16.msra.mxu0 %v1966
    %2073 = vmatprep.subr.bf16.mxu0 %v1963
    %2074 = vmatpush1.bf16.msra.mxu0 %v1962
    %2075 = vmatprep.subr.bf16.mxu0 %v1959
    %2076 = vmatpush1.bf16.msra.mxu0 %v1958
    %2077 = vmatprep.subr.bf16.mxu0 0
    %2078 = vmatpush2.bf16.msra.mxu0 0
    %2079 = vmatprep.subr.bf16.mxu0 0
    %2080 = vmatpush2.bf16.msra.mxu0 0
    %2081 = vmatprep.subr.bf16.mxu0 0
    %2082 = vmatpush2.bf16.msra.mxu0 0
    %2083 = vmatprep.subr.bf16.mxu0 0
    %2084 = vmatpush2.bf16.msra.mxu0 0
    %2085 = vmatprep.subr.bf16.mxu0 0
    %2086 = vmatpush2.bf16.msra.mxu0 0
    %2087 = vmatprep.subr.bf16.mxu0 0
    %2088 = vmatpush2.bf16.msra.mxu0 0
    %2089 = vmatprep.subr.bf16.mxu0 0
    %2090 = vmatpush2.bf16.msra.mxu0 0
    %2091 = vmatprep.subr.bf16.mxu0 0
    %2092 = vmatpush2.bf16.msra.mxu0 0
    %2093 = vmatprep.mubr.bf16.mxu0 0
    %2094 = vmatmul.mubr.bf16.gmra.mxu0 %v1836
    %v2095 = vpop.f32.mrf.mxu0
    %v2096 = vadd.f32 %v1851, %v2095
    %v2097 = vpop.f32.mrf.mxu0
    %v2098 = vadd.f32 %v1855, %v2097
    %v2099 = vpop.f32.mrf.mxu0
    %v2100 = vpop.f32.mrf.mxu0
    %2101 = vdwg.mxu0
    %s2102 = scalar_lea.vmem [#allocation7], 512
    %v2103 = vld [vmem:[%s2102] sm:$0xf]
    %v2104 = vld [vmem:[%s2102 + $0x4] sm:$0xf]
    %v2105 = vld [vmem:[%s2102 + $0x8] sm:$0xf]
    %v2106 = vld [vmem:[%s2102 + $0xc] sm:$0xf]
    %v2107 = vld [vmem:[%s2102 + $0x10] sm:$0xf]
    %v2108 = vld [vmem:[%s2102 + $0x14] sm:$0xf]
    %v2109 = vld [vmem:[%s2102 + $0x18] sm:$0xf]
    %v2110 = vld [vmem:[%s2102 + $0x1c] sm:$0xf]
    %v2111 = vld [vmem:[%s2102 + $0x20] sm:$0xf]
    %v2112 = vld [vmem:[%s2102 + $0x24] sm:$0xf]
    %v2113 = vld [vmem:[%s2102 + $0x28] sm:$0xf]
    %v2114 = vld [vmem:[%s2102 + $0x2c] sm:$0xf]
    %v2115 = vld [vmem:[%s2102 + $0x30] sm:$0xf]
    %v2116 = vld [vmem:[%s2102 + $0x34] sm:$0xf]
    %v2117 = vld [vmem:[%s2102 + $0x38] sm:$0xf]
    %v2118 = vld [vmem:[%s2102 + $0x3c] sm:$0xf]
    %v2119 = vld [vmem:[%s2102 + $0x40] sm:$0xf]
    %v2120 = vld [vmem:[%s2102 + $0x44] sm:$0xf]
    %v2121 = vld [vmem:[%s2102 + $0x48] sm:$0xf]
    %v2122 = vld [vmem:[%s2102 + $0x4c] sm:$0xf]
    %v2123 = vld [vmem:[%s2102 + $0x50] sm:$0xf]
    %v2124 = vld [vmem:[%s2102 + $0x54] sm:$0xf]
    %v2125 = vld [vmem:[%s2102 + $0x58] sm:$0xf]
    %v2126 = vld [vmem:[%s2102 + $0x5c] sm:$0xf]
    %v2127 = vld [vmem:[%s2102 + $0x60] sm:$0xf]
    %v2128 = vld [vmem:[%s2102 + $0x64] sm:$0xf]
    %v2129 = vld [vmem:[%s2102 + $0x68] sm:$0xf]
    %v2130 = vld [vmem:[%s2102 + $0x6c] sm:$0xf]
    %v2131 = vld [vmem:[%s2102 + $0x70] sm:$0xf]
    %v2132 = vld [vmem:[%s2102 + $0x74] sm:$0xf]
    %v2133 = vld [vmem:[%s2102 + $0x78] sm:$0xf]
    %v2134 = vld [vmem:[%s2102 + $0x7c] sm:$0xf]
    %v2135 = vld [vmem:[%s2102 + $0x80] sm:$0xf]
    %v2136 = vld [vmem:[%s2102 + $0x84] sm:$0xf]
    %v2137 = vld [vmem:[%s2102 + $0x88] sm:$0xf]
    %v2138 = vld [vmem:[%s2102 + $0x8c] sm:$0xf]
    %v2139 = vld [vmem:[%s2102 + $0x90] sm:$0xf]
    %v2140 = vld [vmem:[%s2102 + $0x94] sm:$0xf]
    %v2141 = vld [vmem:[%s2102 + $0x98] sm:$0xf]
    %v2142 = vld [vmem:[%s2102 + $0x9c] sm:$0xf]
    %v2143 = vld [vmem:[%s2102 + $0xa0] sm:$0xf]
    %v2144 = vld [vmem:[%s2102 + $0xa4] sm:$0xf]
    %v2145 = vld [vmem:[%s2102 + $0xa8] sm:$0xf]
    %v2146 = vld [vmem:[%s2102 + $0xac] sm:$0xf]
    %v2147 = vld [vmem:[%s2102 + $0xb0] sm:$0xf]
    %v2148 = vld [vmem:[%s2102 + $0xb4] sm:$0xf]
    %v2149 = vld [vmem:[%s2102 + $0xb8] sm:$0xf]
    %v2150 = vld [vmem:[%s2102 + $0xbc] sm:$0xf]
    %v2151 = vld [vmem:[%s2102 + $0xc0] sm:$0xf]
    %v2152 = vld [vmem:[%s2102 + $0xc4] sm:$0xf]
    %v2153 = vld [vmem:[%s2102 + $0xc8] sm:$0xf]
    %v2154 = vld [vmem:[%s2102 + $0xcc] sm:$0xf]
    %v2155 = vld [vmem:[%s2102 + $0xd0] sm:$0xf]
    %v2156 = vld [vmem:[%s2102 + $0xd4] sm:$0xf]
    %v2157 = vld [vmem:[%s2102 + $0xd8] sm:$0xf]
    %v2158 = vld [vmem:[%s2102 + $0xdc] sm:$0xf]
    %v2159 = vld [vmem:[%s2102 + $0xe0] sm:$0xf]
    %v2160 = vld [vmem:[%s2102 + $0xe4] sm:$0xf]
    %v2161 = vld [vmem:[%s2102 + $0xe8] sm:$0xf]
    %v2162 = vld [vmem:[%s2102 + $0xec] sm:$0xf]
    %v2163 = vld [vmem:[%s2102 + $0xf0] sm:$0xf]
    %v2164 = vld [vmem:[%s2102 + $0xf4] sm:$0xf]
    %v2165 = vld [vmem:[%s2102 + $0xf8] sm:$0xf]
    %v2166 = vld [vmem:[%s2102 + $0xfc] sm:$0xf]
    %v2167 = vpack.c.bf16 %v2055, %v2055
    %v2168 = vpack.c.bf16 %v2057, %v2057
    %v2169 = vpack.c.bf16 %v2096, %v2096
    %v2170 = vpack.c.bf16 %v2098, %v2098
    %v2171 = vld [vmem:[#allocation9 + $0x21] ss:$0 sm:$0xff]
    %v2236 = vunpack.c.l.b16 %v2103
    %v2237 = vunpack.c.l.b16 %v2104
    %v2238 = vunpack.c.l.b16 %v2105
    %v2239 = vunpack.c.l.b16 %v2106
    %v2240 = vunpack.c.l.b16 %v2107
    %v2241 = vunpack.c.l.b16 %v2108
    %v2242 = vunpack.c.l.b16 %v2109
    %v2243 = vunpack.c.l.b16 %v2110
    %v2244 = vunpack.c.l.b16 %v2111
    %v2245 = vunpack.c.l.b16 %v2112
    %v2246 = vunpack.c.l.b16 %v2113
    %v2247 = vunpack.c.l.b16 %v2114
    %v2248 = vunpack.c.l.b16 %v2115
    %v2249 = vunpack.c.l.b16 %v2116
    %v2250 = vunpack.c.l.b16 %v2117
    %v2251 = vunpack.c.l.b16 %v2118
    %v2252 = vunpack.c.l.b16 %v2119
    %v2253 = vunpack.c.l.b16 %v2120
    %v2254 = vunpack.c.l.b16 %v2121
    %v2255 = vunpack.c.l.b16 %v2122
    %v2256 = vunpack.c.l.b16 %v2123
    %v2257 = vunpack.c.l.b16 %v2124
    %v2258 = vunpack.c.l.b16 %v2125
    %v2259 = vunpack.c.l.b16 %v2126
    %v2260 = vunpack.c.l.b16 %v2127
    %v2261 = vunpack.c.l.b16 %v2128
    %v2262 = vunpack.c.l.b16 %v2129
    %v2263 = vunpack.c.l.b16 %v2130
    %v2264 = vunpack.c.l.b16 %v2131
    %v2265 = vunpack.c.l.b16 %v2132
    %v2266 = vunpack.c.l.b16 %v2133
    %v2267 = vunpack.c.l.b16 %v2134
    %v2268 = vunpack.c.l.b16 %v2135
    %v2269 = vunpack.c.l.b16 %v2136
    %v2270 = vunpack.c.l.b16 %v2137
    %v2271 = vunpack.c.l.b16 %v2138
    %v2272 = vunpack.c.l.b16 %v2139
    %v2273 = vunpack.c.l.b16 %v2140
    %v2274 = vunpack.c.l.b16 %v2141
    %v2275 = vunpack.c.l.b16 %v2142
    %v2276 = vunpack.c.l.b16 %v2143
    %v2277 = vunpack.c.l.b16 %v2144
    %v2278 = vunpack.c.l.b16 %v2145
    %v2279 = vunpack.c.l.b16 %v2146
    %v2280 = vunpack.c.l.b16 %v2147
    %v2281 = vunpack.c.l.b16 %v2148
    %v2282 = vunpack.c.l.b16 %v2149
    %v2283 = vunpack.c.l.b16 %v2150
    %v2284 = vunpack.c.l.b16 %v2151
    %v2285 = vunpack.c.l.b16 %v2152
    %v2286 = vunpack.c.l.b16 %v2153
    %v2287 = vunpack.c.l.b16 %v2154
    %v2288 = vunpack.c.l.b16 %v2155
    %v2289 = vunpack.c.l.b16 %v2156
    %v2290 = vunpack.c.l.b16 %v2157
    %v2291 = vunpack.c.l.b16 %v2158
    %v2292 = vunpack.c.l.b16 %v2159
    %v2293 = vunpack.c.l.b16 %v2160
    %v2294 = vunpack.c.l.b16 %v2161
    %v2295 = vunpack.c.l.b16 %v2162
    %v2296 = vunpack.c.l.b16 %v2163
    %v2297 = vunpack.c.l.b16 %v2164
    %v2298 = vunpack.c.l.b16 %v2165
    %v2299 = vunpack.c.l.b16 %v2166
    %v2300 = vpack.c.b16 %v2237, %v2236
    %v2301 = vpack.c.b16 %v2239, %v2238
    %v2302 = vpack.c.b16 %v2241, %v2240
    %v2303 = vpack.c.b16 %v2243, %v2242
    %v2304 = vpack.c.b16 %v2245, %v2244
    %v2305 = vpack.c.b16 %v2247, %v2246
    %v2306 = vpack.c.b16 %v2249, %v2248
    %v2307 = vpack.c.b16 %v2251, %v2250
    %v2308 = vpack.c.b16 %v2253, %v2252
    %v2309 = vpack.c.b16 %v2255, %v2254
    %v2310 = vpack.c.b16 %v2257, %v2256
    %v2311 = vpack.c.b16 %v2259, %v2258
    %v2312 = vpack.c.b16 %v2261, %v2260
    %v2313 = vpack.c.b16 %v2263, %v2262
    %v2314 = vpack.c.b16 %v2265, %v2264
    %v2315 = vpack.c.b16 %v2267, %v2266
    %v2316 = vpack.c.b16 %v2269, %v2268
    %v2317 = vpack.c.b16 %v2271, %v2270
    %v2318 = vpack.c.b16 %v2273, %v2272
    %v2319 = vpack.c.b16 %v2275, %v2274
    %v2320 = vpack.c.b16 %v2277, %v2276
    %v2321 = vpack.c.b16 %v2279, %v2278
    %v2322 = vpack.c.b16 %v2281, %v2280
    %v2323 = vpack.c.b16 %v2283, %v2282
    %v2324 = vpack.c.b16 %v2285, %v2284
    %v2325 = vpack.c.b16 %v2287, %v2286
    %v2326 = vpack.c.b16 %v2289, %v2288
    %v2327 = vpack.c.b16 %v2291, %v2290
    %v2328 = vpack.c.b16 %v2293, %v2292
    %v2329 = vpack.c.b16 %v2295, %v2294
    %v2330 = vpack.c.b16 %v2297, %v2296
    %v2331 = vpack.c.b16 %v2299, %v2298
    %2364 = vmatprep.subr.bf16.mxu0 0
    %2365 = vmatpush1.bf16.msra.mxu0 %v2307
    %2366 = vmatprep.subr.bf16.mxu0 0
    %2367 = vmatpush1.bf16.msra.mxu0 %v2306
    %2368 = vmatprep.subr.bf16.mxu0 0
    %2369 = vmatpush1.bf16.msra.mxu0 %v2305
    %2370 = vmatprep.subr.bf16.mxu0 0
    %2371 = vmatpush1.bf16.msra.mxu0 %v2304
    %2372 = vmatprep.subr.bf16.mxu0 0
    %2373 = vmatpush1.bf16.msra.mxu0 %v2303
    %2374 = vmatprep.subr.bf16.mxu0 0
    %2375 = vmatpush1.bf16.msra.mxu0 %v2302
    %2376 = vmatprep.subr.bf16.mxu0 0
    %2377 = vmatpush1.bf16.msra.mxu0 %v2301
    %2378 = vmatprep.subr.bf16.mxu0 0
    %2379 = vmatpush1.bf16.msra.mxu0 %v2300
    %2380 = vmatprep.subr.bf16.mxu0 0
    %2381 = vmatpush2.bf16.msra.mxu0 %v2315
    %2382 = vmatprep.subr.bf16.mxu0 0
    %2383 = vmatpush2.bf16.msra.mxu0 %v2314
    %2384 = vmatprep.subr.bf16.mxu0 0
    %2385 = vmatpush2.bf16.msra.mxu0 %v2313
    %2386 = vmatprep.subr.bf16.mxu0 0
    %2387 = vmatpush2.bf16.msra.mxu0 %v2312
    %2388 = vmatprep.subr.bf16.mxu0 0
    %2389 = vmatpush2.bf16.msra.mxu0 %v2311
    %2390 = vmatprep.subr.bf16.mxu0 0
    %2391 = vmatpush2.bf16.msra.mxu0 %v2310
    %2392 = vmatprep.subr.bf16.mxu0 0
    %2393 = vmatpush2.bf16.msra.mxu0 %v2309
    %2394 = vmatprep.subr.bf16.mxu0 0
    %2395 = vmatpush2.bf16.msra.mxu0 %v2308
    %2396 = vmatprep.mubr.bf16.mxu0 %v2168
    %2397 = vmatmul.mubr.bf16.gmra.mxu0 %v2167
    %v2398 = vpop.f32.mrf.mxu0
    %v2399 = vadd.f32 %v2171, %v2398
    %v2400 = vpop.f32.mrf.mxu0
    %v2401 = vpop.f32.mrf.mxu0
    %v2402 = vpop.f32.mrf.mxu0
    %2403 = vdwg.mxu0
    %2404 = vmatprep.subr.bf16.mxu0 0
    %2405 = vmatpush1.bf16.msra.mxu0 %v2323
    %2406 = vmatprep.subr.bf16.mxu0 0
    %2407 = vmatpush1.bf16.msra.mxu0 %v2322
    %2408 = vmatprep.subr.bf16.mxu0 0
    %2409 = vmatpush1.bf16.msra.mxu0 %v2321
    %2410 = vmatprep.subr.bf16.mxu0 0
    %2411 = vmatpush1.bf16.msra.mxu0 %v2320
    %2412 = vmatprep.subr.bf16.mxu0 0
    %2413 = vmatpush1.bf16.msra.mxu0 %v2319
    %2414 = vmatprep.subr.bf16.mxu0 0
    %2415 = vmatpush1.bf16.msra.mxu0 %v2318
    %2416 = vmatprep.subr.bf16.mxu0 0
    %2417 = vmatpush1.bf16.msra.mxu0 %v2317
    %2418 = vmatprep.subr.bf16.mxu0 0
    %2419 = vmatpush1.bf16.msra.mxu0 %v2316
    %2420 = vmatprep.subr.bf16.mxu0 0
    %2421 = vmatpush2.bf16.msra.mxu0 %v2331
    %2422 = vmatprep.subr.bf16.mxu0 0
    %2423 = vmatpush2.bf16.msra.mxu0 %v2330
    %2424 = vmatprep.subr.bf16.mxu0 0
    %2425 = vmatpush2.bf16.msra.mxu0 %v2329
    %2426 = vmatprep.subr.bf16.mxu0 0
    %2427 = vmatpush2.bf16.msra.mxu0 %v2328
    %2428 = vmatprep.subr.bf16.mxu0 0
    %2429 = vmatpush2.bf16.msra.mxu0 %v2327
    %2430 = vmatprep.subr.bf16.mxu0 0
    %2431 = vmatpush2.bf16.msra.mxu0 %v2326
    %2432 = vmatprep.subr.bf16.mxu0 0
    %2433 = vmatpush2.bf16.msra.mxu0 %v2325
    %2434 = vmatprep.subr.bf16.mxu0 0
    %2435 = vmatpush2.bf16.msra.mxu0 %v2324
    %2436 = vmatprep.mubr.bf16.mxu0 %v2170
    %2437 = vmatmul.mubr.bf16.gmra.mxu0 %v2169
    %v2438 = vpop.f32.mrf.mxu0
    %v2439 = vadd.f32 %v2399, %v2438
    %v2440 = vpop.f32.mrf.mxu0
    %v2441 = vpop.f32.mrf.mxu0
    %v2442 = vpop.f32.mrf.mxu0
    %2443 = vdwg.mxu0
    %s2444 = scalar_lea.vmem %s6, 16
    %2445 = vst [vmem:[%s2444] sm:$0xff] %v2439
    // Predicated region
    $region46: #{forward.1} parent=1 // pred_check
      _
    $region47: #{forward.1} parent=1 // pred_check_branch
      %2447 = sbr.rel (0) target = $region49
    $region48: #{forward.1} parent=1 // pred_region
      _
    $region49: #{forward.1} parent=1 // pred_fallthru
      _
    // Predicated region
    $region50: #{forward.1} parent=1 // pred_check
      _
    $region51: #{forward.1} parent=1 // pred_check_branch
      %2449 = sbr.rel (0) target = $region53
    $region52: #{forward.1} parent=1 // pred_region
      _
    $region53: #{forward.1} parent=1 // pred_fallthru
      _
    %2450 = vsyncpa [#allocation3], 1
    %2451 = vsyncpa [#allocation5], 1
    %2452 = vsyncpa [#allocation8], 1

</llo_original>
